<compile_context>
chip_gen: v5e
topology: v5e:2x2
jax: 0.10.0
libtpu: 0.0.40
codegen_flags: <defaults>
</compile_context>

<pallas_src>
import functools

import jax
import jax.numpy as jnp
from jax.experimental import pallas as pl
from jax.experimental.pallas import tpu as pltpu

INPUT_SIZE = 32 * 32 * 3   # 3072
HIDDEN_SIZE = 128
OUTPUT_SIZE = 10
PADDED_OUT = 128           # lane-dense output width (pad 10 -> 128 lanes)


def _round_up(n, m):
    return ((n + m - 1) // m) * m


def mlp_kernel(x_ref, w1_ref, b1_ref, w2_ref, b2_ref, o_ref):
    # fc1: bf16 MXU matmul with f32 accumulation; bias + ReLU in f32 (VPU).
    xb = x_ref[...]
    if xb.dtype != jnp.bfloat16:
        xb = xb.astype(jnp.bfloat16)
    h = jnp.dot(xb, w1_ref[...], preferred_element_type=jnp.float32)
    h = jnp.maximum(h + b1_ref[...], 0.0)
    # fc2: lane-dense (TB, 128) tile; extra columns are zero-padded weights.
    y = jnp.dot(h.astype(jnp.bfloat16), w2_ref[...],
                preferred_element_type=jnp.float32)
    o_ref[...] = (y + b2_ref[...]).astype(o_ref.dtype)


def _choose_tb(B, tb_cap):
    """Batch tile: multiple of 8, capped, and small enough that the grid has
    >= 2 steps when B allows it (so v7x's two TensorCores both get work)."""
    cap = max(8, _round_up(tb_cap, 8))
    if B <= 8:
        return 8
    half = _round_up(pl.cdiv(B, 2), 8)
    return min(cap, half)


@functools.partial(jax.jit, static_argnames=("tb",))
def mlp_forward(x, w1, b1, w2, b2, *, tb=512):
    """x: [B, INPUT_SIZE] f32 or bf16.
    w1: [INPUT_SIZE, HIDDEN] bf16, b1: [1, HIDDEN] f32,
    w2: [HIDDEN, PADDED_OUT] bf16, b2: [1, PADDED_OUT] f32  (see pack_params).
    Returns [B, OUTPUT_SIZE] f32."""
    B = x.shape[0]
    TB = _choose_tb(B, tb)
    grid = (pl.cdiv(B, TB),)   # ragged last block handled by Pallas masking

    x_bytes = x.size * x.dtype.itemsize
    flops = 2 * B * INPUT_SIZE * HIDDEN_SIZE + 2 * B * HIDDEN_SIZE * PADDED_OUT
    bytes_accessed = (x_bytes + w1.size * 2 + b1.size * 4
                      + w2.size * 2 + b2.size * 4 + B * PADDED_OUT * 4)

    out = pl.pallas_call(
        mlp_kernel,
        out_shape=jax.ShapeDtypeStruct((B, PADDED_OUT), jnp.float32),
        grid=grid,
        in_specs=[
            # x streamed (double-buffered by default).
            pl.BlockSpec((TB, INPUT_SIZE), lambda i: (i, 0)),
            # Weights/biases: constant index_map -> VMEM-resident; single
            # pipeline buffer since they are never re-fetched.
            pl.BlockSpec((INPUT_SIZE, HIDDEN_SIZE), lambda i: (0, 0),
                         pipeline_mode=pl.Buffered(1)),
            pl.BlockSpec((1, HIDDEN_SIZE), lambda i: (0, 0),
                         pipeline_mode=pl.Buffered(1)),
            pl.BlockSpec((HIDDEN_SIZE, PADDED_OUT), lambda i: (0, 0),
                         pipeline_mode=pl.Buffered(1)),
            pl.BlockSpec((1, PADDED_OUT), lambda i: (0, 0),
                         pipeline_mode=pl.Buffered(1)),
        ],
        out_specs=pl.BlockSpec((TB, PADDED_OUT), lambda i: (i, 0)),
        compiler_params=pltpu.CompilerParams(
            dimension_semantics=("parallel",),
            vmem_limit_bytes=48 * 1024 * 1024,
        ),
        cost_estimate=pl.CostEstimate(
            flops=flops, transcendentals=0, bytes_accessed=bytes_accessed),
    )(x, w1, b1, w2, b2)
    # Slice stays inside this jit so XLA fuses it (no extra f32 slab re-read).
    return out[:, :OUTPUT_SIZE]


def init_params(key):
    """Deterministic init mirroring nn.Linear default (uniform +/- 1/sqrt(fan_in)),
    stored pre-transposed as [in_features, out_features]."""
    k1, k2, k3, k4 = jax.random.split(key, 4)
    bound1 = 1.0 / jnp.sqrt(INPUT_SIZE)
    bound2 = 1.0 / jnp.sqrt(HIDDEN_SIZE)
    w1 = jax.random.uniform(k1, (INPUT_SIZE, HIDDEN_SIZE), jnp.float32, -bound1, bound1)
    b1 = jax.random.uniform(k2, (HIDDEN_SIZE,), jnp.float32, -bound1, bound1)
    w2 = jax.random.uniform(k3, (HIDDEN_SIZE, OUTPUT_SIZE), jnp.float32, -bound2, bound2)
    b2 = jax.random.uniform(k4, (OUTPUT_SIZE,), jnp.float32, -bound2, bound2)
    return w1, b1, w2, b2


def pack_params(w1, b1, w2, b2):
    """Kernel layout: bf16 weights (halve HBM traffic), f32 biases,
    fc2 zero-padded to 128 output lanes."""
    w1p = w1.astype(jnp.bfloat16)
    b1p = b1.reshape(1, HIDDEN_SIZE).astype(jnp.float32)
    w2p = jnp.zeros((HIDDEN_SIZE, PADDED_OUT), jnp.bfloat16)
    w2p = w2p.at[:, :OUTPUT_SIZE].set(w2.astype(jnp.bfloat16))
    b2p = jnp.zeros((1, PADDED_OUT), jnp.float32)
    b2p = b2p.at[0, :OUTPUT_SIZE].set(b2.astype(jnp.float32))
    return w1p, b1p, w2p, b2p


if __name__ == "__main__":
    key = jax.random.PRNGKey(0)
    kx, kp = jax.random.split(key)

    B = 2
    x = jax.random.normal(kx, (B, INPUT_SIZE), jnp.float32)
    w1, b1, w2, b2 = init_params(kp)
    w1p, b1p, w2p, b2p = pack_params(w1, b1, w2, b2)

    out = jax.block_until_ready(mlp_forward(x, w1p, b1p, w2p, b2p))
    assert out.shape == (B, OUTPUT_SIZE)

    # Tight check against a reference that applies the same bf16 quantization
    # of the matmul operands (the kernel accumulates in f32 on the MXU).
    def ref_quantized(xv):
        xq = xv.astype(jnp.bfloat16).astype(jnp.float32)
        h = jnp.maximum(xq @ w1p.astype(jnp.float32) + b1p, 0.0)
        hq = h.astype(jnp.bfloat16).astype(jnp.float32)
        return (hq @ w2p.astype(jnp.float32) + b2p)[:, :OUTPUT_SIZE]

    assert jnp.allclose(out, ref_quantized(x), atol=1e-3, rtol=1e-3)

    # Loose check against the original full-f32 module semantics.
    # NOTE: matmul operands are deliberately bf16-quantized (accuracy/BW
    # trade-off), hence the looser tolerance vs. the f32 PyTorch module.
    ref_f32 = jnp.maximum(x @ w1 + b1[None, :], 0.0) @ w2 + b2[None, :]
    assert jnp.allclose(out, ref_f32, atol=5e-2, rtol=5e-2)

    # Exercise the ragged multi-tile grid path (B not a multiple of TB,
    # no wrapper-side padding copy).
    B2 = 300
    x2 = jax.random.normal(jax.random.PRNGKey(1), (B2, INPUT_SIZE), jnp.float32)
    out2 = jax.block_until_ready(mlp_forward(x2, w1p, b1p, w2p, b2p, tb=128))
    assert out2.shape == (B2, OUTPUT_SIZE)
    assert jnp.allclose(out2, ref_quantized(x2), atol=1e-3, rtol=1e-3)

    # Exercise the bf16-x fast path (producer emits bf16: halves the dominant
    # HBM stream; no in-kernel cast of x).
    x2_bf16 = x2.astype(jnp.bfloat16)
    out3 = jax.block_until_ready(mlp_forward(x2_bf16, w1p, b1p, w2p, b2p, tb=128))
    assert out3.shape == (B2, OUTPUT_SIZE)
    assert jnp.allclose(out3, ref_quantized(x2), atol=1e-3, rtol=1e-3)

    print("KERNEL_OK")
</pallas_src>

<mosaic_0001>
module attributes {stable_mosaic.version = 11 : i64} {
  func.func @mlp_kernel(%arg0: i32, %arg1: memref<8x3072xf32, #tpu.memory_space<vmem>>, %arg2: memref<3072x128xbf16, #tpu.memory_space<vmem>>, %arg3: memref<1x128xf32, #tpu.memory_space<vmem>>, %arg4: memref<128x128xbf16, #tpu.memory_space<vmem>>, %arg5: memref<1x128xf32, #tpu.memory_space<vmem>>, %arg6: memref<8x128xf32, #tpu.memory_space<vmem>>) attributes {dimension_semantics = [#tpu.dimension_semantics<parallel>], iteration_bounds = array<i64: 1>, scalar_prefetch = 0 : i64, scratch_operands = 0 : i64, tpu.core_type = #tpu.core_type<tc>, window_params = [{transform_indices = @transform_0, window_bounds = array<i64: 8, 3072>}, {pipeline_mode = #tpu.pipeline_mode<synchronous>, transform_indices = @transform_1, window_bounds = array<i64: 3072, 128>}, {pipeline_mode = #tpu.pipeline_mode<synchronous>, transform_indices = @transform_2, window_bounds = array<i64: 1, 128>}, {pipeline_mode = #tpu.pipeline_mode<synchronous>, transform_indices = @transform_3, window_bounds = array<i64: 128, 128>}, {pipeline_mode = #tpu.pipeline_mode<synchronous>, transform_indices = @transform_4, window_bounds = array<i64: 1, 128>}, {transform_indices = @transform_5, window_bounds = array<i64: 8, 128>}]} {
    %c0 = arith.constant 0 : index
    %c0_0 = arith.constant 0 : index
    %0 = vector.load %arg1[%c0, %c0_0] : memref<8x3072xf32, #tpu.memory_space<vmem>>, vector<8x3072xf32>
    %1 = arith.truncf %0 : vector<8x3072xf32> to vector<8x3072xbf16>
    %c0_1 = arith.constant 0 : index
    %c0_2 = arith.constant 0 : index
    %2 = vector.load %arg2[%c0_1, %c0_2] : memref<3072x128xbf16, #tpu.memory_space<vmem>>, vector<3072x128xbf16>
    %cst = arith.constant dense<0.000000e+00> : vector<8x128xf32>
    %3 = tpu.matmul %1, %2, %cst {dimension_numbers = #tpu.dot_dimension_numbers<[1], [0], [0], [1], [0, 0, 1, 1], [], []>} : vector<8x3072xbf16>, vector<3072x128xbf16>, vector<8x128xf32> -> vector<8x128xf32>
    %c0_3 = arith.constant 0 : index
    %c0_4 = arith.constant 0 : index
    %4 = vector.load %arg3[%c0_3, %c0_4] : memref<1x128xf32, #tpu.memory_space<vmem>>, vector<1x128xf32>
    %5 = vector.broadcast %4 : vector<1x128xf32> to vector<8x128xf32>
    %6 = arith.addf %3, %5 : vector<8x128xf32>
    %cst_5 = arith.constant 0.000000e+00 : f32
    %7 = vector.broadcast %cst_5 : f32 to vector<8x128xf32>
    %8 = arith.maximumf %6, %7 : vector<8x128xf32>
    %9 = arith.truncf %8 : vector<8x128xf32> to vector<8x128xbf16>
    %c0_6 = arith.constant 0 : index
    %c0_7 = arith.constant 0 : index
    %10 = vector.load %arg4[%c0_6, %c0_7] : memref<128x128xbf16, #tpu.memory_space<vmem>>, vector<128x128xbf16>
    %cst_8 = arith.constant dense<0.000000e+00> : vector<8x128xf32>
    %11 = tpu.matmul %9, %10, %cst_8 {dimension_numbers = #tpu.dot_dimension_numbers<[1], [0], [0], [1], [0, 0, 1, 1], [], []>} : vector<8x128xbf16>, vector<128x128xbf16>, vector<8x128xf32> -> vector<8x128xf32>
    %c0_9 = arith.constant 0 : index
    %c0_10 = arith.constant 0 : index
    %12 = vector.load %arg5[%c0_9, %c0_10] : memref<1x128xf32, #tpu.memory_space<vmem>>, vector<1x128xf32>
    %13 = vector.broadcast %12 : vector<1x128xf32> to vector<8x128xf32>
    %14 = arith.addf %11, %13 : vector<8x128xf32>
    %c0_11 = arith.constant 0 : index
    %c0_12 = arith.constant 0 : index
    %15 = vector.load %arg6[%c0_11, %c0_12] : memref<8x128xf32, #tpu.memory_space<vmem>>, vector<8x128xf32>
    tpu.vector_store %arg6[%c0_11, %c0_12], %14 {strides = array<i32>} : memref<8x128xf32, #tpu.memory_space<vmem>>, vector<8x128xf32>,
    return
  }
  func.func @transform_0(%arg0: i32) -> (i32, i32) {
    %c0_i32 = arith.constant 0 : i32
    %c0_i32_0 = arith.constant 0 : i32
    return %arg0, %c0_i32 : i32, i32
  }
  func.func @transform_1(%arg0: i32) -> (i32, i32) {
    %c0_i32 = arith.constant 0 : i32
    %c0_i32_0 = arith.constant 0 : i32
    %c0_i32_1 = arith.constant 0 : i32
    return %c0_i32, %c0_i32_0 : i32, i32
  }
  func.func @transform_2(%arg0: i32) -> (i32, i32) {
    %c0_i32 = arith.constant 0 : i32
    %c0_i32_0 = arith.constant 0 : i32
    %c0_i32_1 = arith.constant 0 : i32
    return %c0_i32, %c0_i32_0 : i32, i32
  }
  func.func @transform_3(%arg0: i32) -> (i32, i32) {
    %c0_i32 = arith.constant 0 : i32
    %c0_i32_0 = arith.constant 0 : i32
    %c0_i32_1 = arith.constant 0 : i32
    return %c0_i32, %c0_i32_0 : i32, i32
  }
  func.func @transform_4(%arg0: i32) -> (i32, i32) {
    %c0_i32 = arith.constant 0 : i32
    %c0_i32_0 = arith.constant 0 : i32
    %c0_i32_1 = arith.constant 0 : i32
    return %c0_i32, %c0_i32_0 : i32, i32
  }
  func.func @transform_5(%arg0: i32) -> (i32, i32) {
    %c0_i32 = arith.constant 0 : i32
    %c0_i32_0 = arith.constant 0 : i32
    return %arg0, %c0_i32 : i32, i32
  }
}

</mosaic_0001>

<llo_original>
// kernel: mlp_forward.1
$region0: #{mlp_forward.1}
  #allocation0 [shape = 'u32[]', space=smem, size = 0x4, offset = 0x4, fixed_abs, tag = 'smem constant byte address 0x4 - core index']
  #allocation1 [shape = 'u32[72,128]{1,0:T(1,128)}', space=vmem, size = 0x9000, scoped, tag = 'internal scratch']
  %s0 = inlined_call_operand.hbm [shape: f32[2,3072], index: 0, kind: input, shape index: {}]
  %s1 = inlined_call_operand.hbm [shape: bf16[3072,128], index: 1, kind: input, shape index: {}]
  %s2 = inlined_call_operand.vmem [shape: f32[1,128], index: 2, kind: input, shape index: {}]
  %s3 = inlined_call_operand.hbm [shape: bf16[128,128], index: 3, kind: input, shape index: {}]
  %s4 = inlined_call_operand.vmem [shape: f32[1,128], index: 4, kind: input, shape index: {}]
  %s5 = inlined_call_operand.hbm [shape: f32[2,128], index: 5, kind: output, shape index: {}]
  %s6 = sld [smem:[#allocation0]]
  $region42: #{mlp_forward.1} parent=0
    _
  %s8 = ssub.s32 1, %s6
  %s9 = scalar_select 0, %s8, %s6
  $region1: #{mlp_forward.1} parent=0
    #allocation2 [shape = 'u8[98304]{0}', space=vmem, size = 0x18000, scoped, tag = 'input window, operand 0, single buffered']
    #allocation3 [shape = 's32[1]{0}', space=sflag, size = 0x4, scoped, tag = 'scoped memory for mlp_forward.1']
    #allocation4 [shape = 's32[1]{0}', space=sflag, size = 0x4, scoped, tag = 'scoped memory for mlp_forward.1']
    #allocation5 [shape = 'u8[786432]{0}', space=vmem, size = 0xc0000, scoped, tag = 'input window, operand 1, single buffered']
    #allocation6 [shape = 's32[1]{0}', space=sflag, size = 0x4, scoped, tag = 'scoped memory for mlp_forward.1']
    #allocation7 [shape = 'u8[32768]{0}', space=vmem, size = 0x8000, scoped, tag = 'input window, operand 3, single buffered']
    #allocation8 [shape = 'u8[4096]{0}', space=vmem, size = 0x1000, scoped, tag = 'output window, operand 0, single buffered']
    %10 = vsyncpa [#allocation3], 0
    %11 = vsyncpa [#allocation6], 0
    %12 = vsyncpa [#allocation4], 0
    // Predicated region
    $region2: #{mlp_forward.1} parent=1 // pred_check
      _
    $region3: #{mlp_forward.1} parent=1 // pred_check_branch
      %14 = sbr.rel (0) target = $region5
    $region4: #{mlp_forward.1} parent=1 // pred_region
      %16 = vsyncadd [#allocation3], 2304
      %s17 = sshll.u32 %s0, 4
      %s18 = int_to_ptr.hbm [resolvable:$true] %s17
      %s19 = sshll.u32 [#allocation2], 4
      %s20 = int_to_ptr.vmem [resolvable:$true] %s19
      %25 = dma.hbm_to_vmem [thread:$0]  %s18, 768, %s20, [#allocation3], 768, 768, 48
    $region5: #{mlp_forward.1} parent=1 // pred_fallthru
      _
    // Predicated region
    $region6: #{mlp_forward.1} parent=1 // pred_check
      _
    $region7: #{mlp_forward.1} parent=1 // pred_check_branch
      %27 = sbr.rel (0) target = $region9
    $region8: #{mlp_forward.1} parent=1 // pred_region
      %29 = vsyncadd [#allocation6], 0
      %s30 = sshll.u32 %s1, 4
      %s31 = int_to_ptr.hbm [resolvable:$true] %s30
      %s32 = sshll.u32 [#allocation5], 4
      %s33 = int_to_ptr.vmem [resolvable:$true] %s32
      %38 = dma.hbm_to_vmem [thread:$0]  %s31, 24576, %s33, [#allocation6], 64, 64, 4
    $region9: #{mlp_forward.1} parent=1 // pred_fallthru
      _
    // Predicated region
    $region10: #{mlp_forward.1} parent=1 // pred_check
      _
    $region11: #{mlp_forward.1} parent=1 // pred_check_branch
      %40 = sbr.rel (0) target = $region13
    $region12: #{mlp_forward.1} parent=1 // pred_region
      _
    $region13: #{mlp_forward.1} parent=1 // pred_fallthru
      _
    // Predicated region
    $region14: #{mlp_forward.1} parent=1 // pred_check
      _
    $region15: #{mlp_forward.1} parent=1 // pred_check_branch
      %42 = sbr.rel (0) target = $region17
    $region16: #{mlp_forward.1} parent=1 // pred_region
      %44 = vsyncadd [#allocation6], 0
      %s45 = sshll.u32 %s3, 4
      %s46 = int_to_ptr.hbm [resolvable:$true] %s45
      %s47 = sshll.u32 [#allocation7], 4
      %s48 = int_to_ptr.vmem [resolvable:$true] %s47
      %53 = dma.hbm_to_vmem [thread:$0]  %s46, 1024, %s48, [#allocation6], 64, 64, 4
    $region17: #{mlp_forward.1} parent=1 // pred_fallthru
      _
    // Predicated region
    $region18: #{mlp_forward.1} parent=1 // pred_check
      _
    $region19: #{mlp_forward.1} parent=1 // pred_check_branch
      %55 = sbr.rel (0) target = $region21
    $region20: #{mlp_forward.1} parent=1 // pred_region
      _
    $region21: #{mlp_forward.1} parent=1 // pred_fallthru
      _
    // Predicated region
    $region22: #{mlp_forward.1} parent=1 // pred_check
      _
    $region23: #{mlp_forward.1} parent=1 // pred_check_branch
      %57 = sbr.rel (0) target = $region25
    $region24: #{mlp_forward.1} parent=1 // pred_region
      %59 = dma.done [#allocation3], 3072
    $region25: #{mlp_forward.1} parent=1 // pred_fallthru
      _
    // Predicated region
    $region26: #{mlp_forward.1} parent=1 // pred_check
      _
    $region27: #{mlp_forward.1} parent=1 // pred_check_branch
      %61 = sbr.rel (0) target = $region29
    $region28: #{mlp_forward.1} parent=1 // pred_region
      %63 = dma.done [#allocation6], 24576
    $region29: #{mlp_forward.1} parent=1 // pred_fallthru
      _
    // Predicated region
    $region30: #{mlp_forward.1} parent=1 // pred_check
      _
    $region31: #{mlp_forward.1} parent=1 // pred_check_branch
      %65 = sbr.rel (0) target = $region33
    $region32: #{mlp_forward.1} parent=1 // pred_region
      %67 = dma.done [#allocation6], 1024
    $region33: #{mlp_forward.1} parent=1 // pred_fallthru
      _
    %v68 = vld [vmem:[#allocation2] sm:$0xff]
    %v69 = vld [vmem:[#allocation2 + $0x8] sm:$0xff]
    %v70 = vld [vmem:[#allocation2 + $0x10] sm:$0xff]
    %v71 = vld [vmem:[#allocation2 + $0x18] sm:$0xff]
    %v72 = vld [vmem:[#allocation2 + $0x20] sm:$0xff]
    %v73 = vld [vmem:[#allocation2 + $0x28] sm:$0xff]
    %v74 = vld [vmem:[#allocation2 + $0x30] sm:$0xff]
    %v75 = vld [vmem:[#allocation2 + $0x38] sm:$0xff]
    %v76 = vld [vmem:[#allocation2 + $0x40] sm:$0xff]
    %v77 = vld [vmem:[#allocation2 + $0x48] sm:$0xff]
    %v78 = vld [vmem:[#allocation2 + $0x50] sm:$0xff]
    %v79 = vld [vmem:[#allocation2 + $0x58] sm:$0xff]
    %v80 = vld [vmem:[#allocation2 + $0x60] sm:$0xff]
    %v81 = vld [vmem:[#allocation2 + $0x68] sm:$0xff]
    %v82 = vld [vmem:[#allocation2 + $0x70] sm:$0xff]
    %v83 = vld [vmem:[#allocation2 + $0x78] sm:$0xff]
    %v84 = vld [vmem:[#allocation2 + $0x80] sm:$0xff]
    %v85 = vld [vmem:[#allocation2 + $0x88] sm:$0xff]
    %v86 = vld [vmem:[#allocation2 + $0x90] sm:$0xff]
    %v87 = vld [vmem:[#allocation2 + $0x98] sm:$0xff]
    %v88 = vld [vmem:[#allocation2 + $0xa0] sm:$0xff]
    %v89 = vld [vmem:[#allocation2 + $0xa8] sm:$0xff]
    %v90 = vld [vmem:[#allocation2 + $0xb0] sm:$0xff]
    %v91 = vld [vmem:[#allocation2 + $0xb8] sm:$0xff]
    %116 = vst [vmem:[#allocation1] ss:$4 sm:$0xff] %v68
    %s117 = scalar_lea.vmem [#allocation1], 1
    %118 = vst [vmem:[%s117] ss:$4 sm:$0xff] %v74
    %s119 = scalar_lea.vmem [#allocation1], 2
    %120 = vst [vmem:[%s119] ss:$4 sm:$0xff] %v80
    %s121 = scalar_lea.vmem [#allocation1], 3
    %122 = vst [vmem:[%s121] ss:$4 sm:$0xff] %v86
    %s123 = scalar_lea.vmem [#allocation1], 32
    %124 = vst [vmem:[%s123] ss:$4 sm:$0xff] %v69
    %s125 = scalar_lea.vmem [#allocation1], 33
    %126 = vst [vmem:[%s125] ss:$4 sm:$0xff] %v75
    %s127 = scalar_lea.vmem [#allocation1], 34
    %128 = vst [vmem:[%s127] ss:$4 sm:$0xff] %v81
    %s129 = scalar_lea.vmem [#allocation1], 35
    %130 = vst [vmem:[%s129] ss:$4 sm:$0xff] %v87
    %v131 = vld.sshfl [vmem:[#allocation1] sm:$0xff pattern:$0x73625140]
    %v132 = vld.sshfl [vmem:[#allocation1 + $0x8] sm:$0xff pattern:$0x73625140]
    %v133 = vld.sshfl [vmem:[#allocation1 + $0x10] sm:$0xff pattern:$0x73625140]
    %v134 = vld.sshfl [vmem:[#allocation1 + $0x18] sm:$0xff pattern:$0x73625140]
    %v135 = vld.sshfl [vmem:[#allocation1 + $0x20] sm:$0xff pattern:$0x73625140]
    %v136 = vld.sshfl [vmem:[#allocation1 + $0x28] sm:$0xff pattern:$0x73625140]
    %v137 = vld.sshfl [vmem:[#allocation1 + $0x30] sm:$0xff pattern:$0x73625140]
    %v138 = vld.sshfl [vmem:[#allocation1 + $0x38] sm:$0xff pattern:$0x73625140]
    %139 = vst [vmem:[#allocation1] ss:$4 sm:$0xff] %v70
    %140 = vst [vmem:[%s117] ss:$4 sm:$0xff] %v76
    %141 = vst [vmem:[%s119] ss:$4 sm:$0xff] %v82
    %142 = vst [vmem:[%s121] ss:$4 sm:$0xff] %v88
    %143 = vst [vmem:[%s123] ss:$4 sm:$0xff] %v71
    %144 = vst [vmem:[%s125] ss:$4 sm:$0xff] %v77
    %145 = vst [vmem:[%s127] ss:$4 sm:$0xff] %v83
    %146 = vst [vmem:[%s129] ss:$4 sm:$0xff] %v89
    %v147 = vld.sshfl [vmem:[#allocation1] sm:$0xff pattern:$0x73625140]
    %v148 = vld.sshfl [vmem:[#allocation1 + $0x8] sm:$0xff pattern:$0x73625140]
    %v149 = vld.sshfl [vmem:[#allocation1 + $0x10] sm:$0xff pattern:$0x73625140]
    %v150 = vld.sshfl [vmem:[#allocation1 + $0x18] sm:$0xff pattern:$0x73625140]
    %v151 = vld.sshfl [vmem:[#allocation1 + $0x20] sm:$0xff pattern:$0x73625140]
    %v152 = vld.sshfl [vmem:[#allocation1 + $0x28] sm:$0xff pattern:$0x73625140]
    %v153 = vld.sshfl [vmem:[#allocation1 + $0x30] sm:$0xff pattern:$0x73625140]
    %v154 = vld.sshfl [vmem:[#allocation1 + $0x38] sm:$0xff pattern:$0x73625140]
    %155 = vst [vmem:[#allocation1] ss:$4 sm:$0xff] %v72
    %156 = vst [vmem:[%s117] ss:$4 sm:$0xff] %v78
    %157 = vst [vmem:[%s119] ss:$4 sm:$0xff] %v84
    %158 = vst [vmem:[%s121] ss:$4 sm:$0xff] %v90
    %159 = vst [vmem:[%s123] ss:$4 sm:$0xff] %v73
    %160 = vst [vmem:[%s125] ss:$4 sm:$0xff] %v79
    %161 = vst [vmem:[%s127] ss:$4 sm:$0xff] %v85
    %162 = vst [vmem:[%s129] ss:$4 sm:$0xff] %v91
    %v163 = vld.sshfl [vmem:[#allocation1] sm:$0xff pattern:$0x73625140]
    %v164 = vld.sshfl [vmem:[#allocation1 + $0x8] sm:$0xff pattern:$0x73625140]
    %v165 = vld.sshfl [vmem:[#allocation1 + $0x10] sm:$0xff pattern:$0x73625140]
    %v166 = vld.sshfl [vmem:[#allocation1 + $0x18] sm:$0xff pattern:$0x73625140]
    %v167 = vld.sshfl [vmem:[#allocation1 + $0x20] sm:$0xff pattern:$0x73625140]
    %v168 = vld.sshfl [vmem:[#allocation1 + $0x28] sm:$0xff pattern:$0x73625140]
    %v169 = vld.sshfl [vmem:[#allocation1 + $0x30] sm:$0xff pattern:$0x73625140]
    %v170 = vld.sshfl [vmem:[#allocation1 + $0x38] sm:$0xff pattern:$0x73625140]
    %v195 = vpack.c.bf16 %v131, %v131
    %v196 = vpack.c.bf16 %v132, %v132
    %v197 = vpack.c.bf16 %v133, %v133
    %v198 = vpack.c.bf16 %v134, %v134
    %v199 = vpack.c.bf16 %v135, %v135
    %v200 = vpack.c.bf16 %v136, %v136
    %v201 = vpack.c.bf16 %v137, %v137
    %v202 = vpack.c.bf16 %v138, %v138
    %v203 = vpack.c.bf16 %v147, %v147
    %v204 = vpack.c.bf16 %v148, %v148
    %v205 = vpack.c.bf16 %v149, %v149
    %v206 = vpack.c.bf16 %v150, %v150
    %v207 = vpack.c.bf16 %v151, %v151
    %v208 = vpack.c.bf16 %v152, %v152
    %v209 = vpack.c.bf16 %v153, %v153
    %v210 = vpack.c.bf16 %v154, %v154
    %v211 = vpack.c.bf16 %v163, %v163
    %v212 = vpack.c.bf16 %v164, %v164
    %v213 = vpack.c.bf16 %v165, %v165
    %v214 = vpack.c.bf16 %v166, %v166
    %v215 = vpack.c.bf16 %v167, %v167
    %v216 = vpack.c.bf16 %v168, %v168
    %v217 = vpack.c.bf16 %v169, %v169
    %v218 = vpack.c.bf16 %v170, %v170
    %v219 = vld [vmem:[#allocation5] sm:$0xf]
    %v220 = vld [vmem:[#allocation5 + $0x4] sm:$0xf]
    %v221 = vld [vmem:[#allocation5 + $0x8] sm:$0xf]
    %v222 = vld [vmem:[#allocation5 + $0xc] sm:$0xf]
    %v223 = vld [vmem:[#allocation5 + $0x10] sm:$0xf]
    %v224 = vld [vmem:[#allocation5 + $0x14] sm:$0xf]
    %v225 = vld [vmem:[#allocation5 + $0x18] sm:$0xf]
    %v226 = vld [vmem:[#allocation5 + $0x1c] sm:$0xf]
    %v227 = vld [vmem:[#allocation5 + $0x20] sm:$0xf]
    %v228 = vld [vmem:[#allocation5 + $0x24] sm:$0xf]
    %v229 = vld [vmem:[#allocation5 + $0x28] sm:$0xf]
    %v230 = vld [vmem:[#allocation5 + $0x2c] sm:$0xf]
    %v231 = vld [vmem:[#allocation5 + $0x30] sm:$0xf]
    %v232 = vld [vmem:[#allocation5 + $0x34] sm:$0xf]
    %v233 = vld [vmem:[#allocation5 + $0x38] sm:$0xf]
    %v234 = vld [vmem:[#allocation5 + $0x3c] sm:$0xf]
    %v235 = vld [vmem:[#allocation5 + $0x40] sm:$0xf]
    %v236 = vld [vmem:[#allocation5 + $0x44] sm:$0xf]
    %v237 = vld [vmem:[#allocation5 + $0x48] sm:$0xf]
    %v238 = vld [vmem:[#allocation5 + $0x4c] sm:$0xf]
    %v239 = vld [vmem:[#allocation5 + $0x50] sm:$0xf]
    %v240 = vld [vmem:[#allocation5 + $0x54] sm:$0xf]
    %v241 = vld [vmem:[#allocation5 + $0x58] sm:$0xf]
    %v242 = vld [vmem:[#allocation5 + $0x5c] sm:$0xf]
    %v243 = vld [vmem:[#allocation5 + $0x60] sm:$0xf]
    %v244 = vld [vmem:[#allocation5 + $0x64] sm:$0xf]
    %v245 = vld [vmem:[#allocation5 + $0x68] sm:$0xf]
    %v246 = vld [vmem:[#allocation5 + $0x6c] sm:$0xf]
    %v247 = vld [vmem:[#allocation5 + $0x70] sm:$0xf]
    %v248 = vld [vmem:[#allocation5 + $0x74] sm:$0xf]
    %v249 = vld [vmem:[#allocation5 + $0x78] sm:$0xf]
    %v250 = vld [vmem:[#allocation5 + $0x7c] sm:$0xf]
    %v251 = vld [vmem:[#allocation5 + $0x80] sm:$0xf]
    %v252 = vld [vmem:[#allocation5 + $0x84] sm:$0xf]
    %v253 = vld [vmem:[#allocation5 + $0x88] sm:$0xf]
    %v254 = vld [vmem:[#allocation5 + $0x8c] sm:$0xf]
    %v255 = vld [vmem:[#allocation5 + $0x90] sm:$0xf]
    %v256 = vld [vmem:[#allocation5 + $0x94] sm:$0xf]
    %v257 = vld [vmem:[#allocation5 + $0x98] sm:$0xf]
    %v258 = vld [vmem:[#allocation5 + $0x9c] sm:$0xf]
    %v259 = vld [vmem:[#allocation5 + $0xa0] sm:$0xf]
    %v260 = vld [vmem:[#allocation5 + $0xa4] sm:$0xf]
    %v261 = vld [vmem:[#allocation5 + $0xa8] sm:$0xf]
    %v262 = vld [vmem:[#allocation5 + $0xac] sm:$0xf]
    %v263 = vld [vmem:[#allocation5 + $0xb0] sm:$0xf]
    %v264 = vld [vmem:[#allocation5 + $0xb4] sm:$0xf]
    %v265 = vld [vmem:[#allocation5 + $0xb8] sm:$0xf]
    %v266 = vld [vmem:[#allocation5 + $0xbc] sm:$0xf]
    %v267 = vld [vmem:[#allocation5 + $0xc0] sm:$0xf]
    %v268 = vld [vmem:[#allocation5 + $0xc4] sm:$0xf]
    %v269 = vld [vmem:[#allocation5 + $0xc8] sm:$0xf]
    %v270 = vld [vmem:[#allocation5 + $0xcc] sm:$0xf]
    %v271 = vld [vmem:[#allocation5 + $0xd0] sm:$0xf]
    %v272 = vld [vmem:[#allocation5 + $0xd4] sm:$0xf]
    %v273 = vld [vmem:[#allocation5 + $0xd8] sm:$0xf]
    %v274 = vld [vmem:[#allocation5 + $0xdc] sm:$0xf]
    %v275 = vld [vmem:[#allocation5 + $0xe0] sm:$0xf]
    %v276 = vld [vmem:[#allocation5 + $0xe4] sm:$0xf]
    %v277 = vld [vmem:[#allocation5 + $0xe8] sm:$0xf]
    %v278 = vld [vmem:[#allocation5 + $0xec] sm:$0xf]
    %v279 = vld [vmem:[#allocation5 + $0xf0] sm:$0xf]
    %v280 = vld [vmem:[#allocation5 + $0xf4] sm:$0xf]
    %v281 = vld [vmem:[#allocation5 + $0xf8] sm:$0xf]
    %v282 = vld [vmem:[#allocation5 + $0xfc] sm:$0xf]
    %v283 = vld [vmem:[#allocation5 + $0x100] sm:$0xf]
    %v284 = vld [vmem:[#allocation5 + $0x104] sm:$0xf]
    %v285 = vld [vmem:[#allocation5 + $0x108] sm:$0xf]
    %v286 = vld [vmem:[#allocation5 + $0x10c] sm:$0xf]
    %v287 = vld [vmem:[#allocation5 + $0x110] sm:$0xf]
    %v288 = vld [vmem:[#allocation5 + $0x114] sm:$0xf]
    %v289 = vld [vmem:[#allocation5 + $0x118] sm:$0xf]
    %v290 = vld [vmem:[#allocation5 + $0x11c] sm:$0xf]
    %v291 = vld [vmem:[#allocation5 + $0x120] sm:$0xf]
    %v292 = vld [vmem:[#allocation5 + $0x124] sm:$0xf]
    %v293 = vld [vmem:[#allocation5 + $0x128] sm:$0xf]
    %v294 = vld [vmem:[#allocation5 + $0x12c] sm:$0xf]
    %v295 = vld [vmem:[#allocation5 + $0x130] sm:$0xf]
    %v296 = vld [vmem:[#allocation5 + $0x134] sm:$0xf]
    %v297 = vld [vmem:[#allocation5 + $0x138] sm:$0xf]
    %v298 = vld [vmem:[#allocation5 + $0x13c] sm:$0xf]
    %v299 = vld [vmem:[#allocation5 + $0x140] sm:$0xf]
    %v300 = vld [vmem:[#allocation5 + $0x144] sm:$0xf]
    %v301 = vld [vmem:[#allocation5 + $0x148] sm:$0xf]
    %v302 = vld [vmem:[#allocation5 + $0x14c] sm:$0xf]
    %v303 = vld [vmem:[#allocation5 + $0x150] sm:$0xf]
    %v304 = vld [vmem:[#allocation5 + $0x154] sm:$0xf]
    %v305 = vld [vmem:[#allocation5 + $0x158] sm:$0xf]
    %v306 = vld [vmem:[#allocation5 + $0x15c] sm:$0xf]
    %v307 = vld [vmem:[#allocation5 + $0x160] sm:$0xf]
    %v308 = vld [vmem:[#allocation5 + $0x164] sm:$0xf]
    %v309 = vld [vmem:[#allocation5 + $0x168] sm:$0xf]
    %v310 = vld [vmem:[#allocation5 + $0x16c] sm:$0xf]
    %v311 = vld [vmem:[#allocation5 + $0x170] sm:$0xf]
    %v312 = vld [vmem:[#allocation5 + $0x174] sm:$0xf]
    %v313 = vld [vmem:[#allocation5 + $0x178] sm:$0xf]
    %v314 = vld [vmem:[#allocation5 + $0x17c] sm:$0xf]
    %v315 = vld [vmem:[#allocation5 + $0x180] sm:$0xf]
    %v316 = vld [vmem:[#allocation5 + $0x184] sm:$0xf]
    %v317 = vld [vmem:[#allocation5 + $0x188] sm:$0xf]
    %v318 = vld [vmem:[#allocation5 + $0x18c] sm:$0xf]
    %v319 = vld [vmem:[#allocation5 + $0x190] sm:$0xf]
    %v320 = vld [vmem:[#allocation5 + $0x194] sm:$0xf]
    %v321 = vld [vmem:[#allocation5 + $0x198] sm:$0xf]
    %v322 = vld [vmem:[#allocation5 + $0x19c] sm:$0xf]
    %v323 = vld [vmem:[#allocation5 + $0x1a0] sm:$0xf]
    %v324 = vld [vmem:[#allocation5 + $0x1a4] sm:$0xf]
    %v325 = vld [vmem:[#allocation5 + $0x1a8] sm:$0xf]
    %v326 = vld [vmem:[#allocation5 + $0x1ac] sm:$0xf]
    %v327 = vld [vmem:[#allocation5 + $0x1b0] sm:$0xf]
    %v328 = vld [vmem:[#allocation5 + $0x1b4] sm:$0xf]
    %v329 = vld [vmem:[#allocation5 + $0x1b8] sm:$0xf]
    %v330 = vld [vmem:[#allocation5 + $0x1bc] sm:$0xf]
    %v331 = vld [vmem:[#allocation5 + $0x1c0] sm:$0xf]
    %v332 = vld [vmem:[#allocation5 + $0x1c4] sm:$0xf]
    %v333 = vld [vmem:[#allocation5 + $0x1c8] sm:$0xf]
    %v334 = vld [vmem:[#allocation5 + $0x1cc] sm:$0xf]
    %v335 = vld [vmem:[#allocation5 + $0x1d0] sm:$0xf]
    %v336 = vld [vmem:[#allocation5 + $0x1d4] sm:$0xf]
    %v337 = vld [vmem:[#allocation5 + $0x1d8] sm:$0xf]
    %v338 = vld [vmem:[#allocation5 + $0x1dc] sm:$0xf]
    %v339 = vld [vmem:[#allocation5 + $0x1e0] sm:$0xf]
    %v340 = vld [vmem:[#allocation5 + $0x1e4] sm:$0xf]
    %v341 = vld [vmem:[#allocation5 + $0x1e8] sm:$0xf]
    %v342 = vld [vmem:[#allocation5 + $0x1ec] sm:$0xf]
    %v343 = vld [vmem:[#allocation5 + $0x1f0] sm:$0xf]
    %v344 = vld [vmem:[#allocation5 + $0x1f4] sm:$0xf]
    %v345 = vld [vmem:[#allocation5 + $0x1f8] sm:$0xf]
    %v346 = vld [vmem:[#allocation5 + $0x1fc] sm:$0xf]
    %v347 = vld [vmem:[#allocation5 + $0x200] sm:$0xf]
    %v348 = vld [vmem:[#allocation5 + $0x204] sm:$0xf]
    %v349 = vld [vmem:[#allocation5 + $0x208] sm:$0xf]
    %v350 = vld [vmem:[#allocation5 + $0x20c] sm:$0xf]
    %v351 = vld [vmem:[#allocation5 + $0x210] sm:$0xf]
    %v352 = vld [vmem:[#allocation5 + $0x214] sm:$0xf]
    %v353 = vld [vmem:[#allocation5 + $0x218] sm:$0xf]
    %v354 = vld [vmem:[#allocation5 + $0x21c] sm:$0xf]
    %v355 = vld [vmem:[#allocation5 + $0x220] sm:$0xf]
    %v356 = vld [vmem:[#allocation5 + $0x224] sm:$0xf]
    %v357 = vld [vmem:[#allocation5 + $0x228] sm:$0xf]
    %v358 = vld [vmem:[#allocation5 + $0x22c] sm:$0xf]
    %v359 = vld [vmem:[#allocation5 + $0x230] sm:$0xf]
    %v360 = vld [vmem:[#allocation5 + $0x234] sm:$0xf]
    %v361 = vld [vmem:[#allocation5 + $0x238] sm:$0xf]
    %v362 = vld [vmem:[#allocation5 + $0x23c] sm:$0xf]
    %v363 = vld [vmem:[#allocation5 + $0x240] sm:$0xf]
    %v364 = vld [vmem:[#allocation5 + $0x244] sm:$0xf]
    %v365 = vld [vmem:[#allocation5 + $0x248] sm:$0xf]
    %v366 = vld [vmem:[#allocation5 + $0x24c] sm:$0xf]
    %v367 = vld [vmem:[#allocation5 + $0x250] sm:$0xf]
    %v368 = vld [vmem:[#allocation5 + $0x254] sm:$0xf]
    %v369 = vld [vmem:[#allocation5 + $0x258] sm:$0xf]
    %v370 = vld [vmem:[#allocation5 + $0x25c] sm:$0xf]
    %v371 = vld [vmem:[#allocation5 + $0x260] sm:$0xf]
    %v372 = vld [vmem:[#allocation5 + $0x264] sm:$0xf]
    %v373 = vld [vmem:[#allocation5 + $0x268] sm:$0xf]
    %v374 = vld [vmem:[#allocation5 + $0x26c] sm:$0xf]
    %v375 = vld [vmem:[#allocation5 + $0x270] sm:$0xf]
    %v376 = vld [vmem:[#allocation5 + $0x274] sm:$0xf]
    %v377 = vld [vmem:[#allocation5 + $0x278] sm:$0xf]
    %v378 = vld [vmem:[#allocation5 + $0x27c] sm:$0xf]
    %v379 = vld [vmem:[#allocation5 + $0x280] sm:$0xf]
    %v380 = vld [vmem:[#allocation5 + $0x284] sm:$0xf]
    %v381 = vld [vmem:[#allocation5 + $0x288] sm:$0xf]
    %v382 = vld [vmem:[#allocation5 + $0x28c] sm:$0xf]
    %v383 = vld [vmem:[#allocation5 + $0x290] sm:$0xf]
    %v384 = vld [vmem:[#allocation5 + $0x294] sm:$0xf]
    %v385 = vld [vmem:[#allocation5 + $0x298] sm:$0xf]
    %v386 = vld [vmem:[#allocation5 + $0x29c] sm:$0xf]
    %v387 = vld [vmem:[#allocation5 + $0x2a0] sm:$0xf]
    %v388 = vld [vmem:[#allocation5 + $0x2a4] sm:$0xf]
    %v389 = vld [vmem:[#allocation5 + $0x2a8] sm:$0xf]
    %v390 = vld [vmem:[#allocation5 + $0x2ac] sm:$0xf]
    %v391 = vld [vmem:[#allocation5 + $0x2b0] sm:$0xf]
    %v392 = vld [vmem:[#allocation5 + $0x2b4] sm:$0xf]
    %v393 = vld [vmem:[#allocation5 + $0x2b8] sm:$0xf]
    %v394 = vld [vmem:[#allocation5 + $0x2bc] sm:$0xf]
    %v395 = vld [vmem:[#allocation5 + $0x2c0] sm:$0xf]
    %v396 = vld [vmem:[#allocation5 + $0x2c4] sm:$0xf]
    %v397 = vld [vmem:[#allocation5 + $0x2c8] sm:$0xf]
    %v398 = vld [vmem:[#allocation5 + $0x2cc] sm:$0xf]
    %v399 = vld [vmem:[#allocation5 + $0x2d0] sm:$0xf]
    %v400 = vld [vmem:[#allocation5 + $0x2d4] sm:$0xf]
    %v401 = vld [vmem:[#allocation5 + $0x2d8] sm:$0xf]
    %v402 = vld [vmem:[#allocation5 + $0x2dc] sm:$0xf]
    %v403 = vld [vmem:[#allocation5 + $0x2e0] sm:$0xf]
    %v404 = vld [vmem:[#allocation5 + $0x2e4] sm:$0xf]
    %v405 = vld [vmem:[#allocation5 + $0x2e8] sm:$0xf]
    %v406 = vld [vmem:[#allocation5 + $0x2ec] sm:$0xf]
    %v407 = vld [vmem:[#allocation5 + $0x2f0] sm:$0xf]
    %v408 = vld [vmem:[#allocation5 + $0x2f4] sm:$0xf]
    %v409 = vld [vmem:[#allocation5 + $0x2f8] sm:$0xf]
    %v410 = vld [vmem:[#allocation5 + $0x2fc] sm:$0xf]
    %v411 = vld [vmem:[#allocation5 + $0x300] sm:$0xf]
    %v412 = vld [vmem:[#allocation5 + $0x304] sm:$0xf]
    %v413 = vld [vmem:[#allocation5 + $0x308] sm:$0xf]
    %v414 = vld [vmem:[#allocation5 + $0x30c] sm:$0xf]
    %v415 = vld [vmem:[#allocation5 + $0x310] sm:$0xf]
    %v416 = vld [vmem:[#allocation5 + $0x314] sm:$0xf]
    %v417 = vld [vmem:[#allocation5 + $0x318] sm:$0xf]
    %v418 = vld [vmem:[#allocation5 + $0x31c] sm:$0xf]
    %v419 = vld [vmem:[#allocation5 + $0x320] sm:$0xf]
    %v420 = vld [vmem:[#allocation5 + $0x324] sm:$0xf]
    %v421 = vld [vmem:[#allocation5 + $0x328] sm:$0xf]
    %v422 = vld [vmem:[#allocation5 + $0x32c] sm:$0xf]
    %v423 = vld [vmem:[#allocation5 + $0x330] sm:$0xf]
    %v424 = vld [vmem:[#allocation5 + $0x334] sm:$0xf]
    %v425 = vld [vmem:[#allocation5 + $0x338] sm:$0xf]
    %v426 = vld [vmem:[#allocation5 + $0x33c] sm:$0xf]
    %v427 = vld [vmem:[#allocation5 + $0x340] sm:$0xf]
    %v428 = vld [vmem:[#allocation5 + $0x344] sm:$0xf]
    %v429 = vld [vmem:[#allocation5 + $0x348] sm:$0xf]
    %v430 = vld [vmem:[#allocation5 + $0x34c] sm:$0xf]
    %v431 = vld [vmem:[#allocation5 + $0x350] sm:$0xf]
    %v432 = vld [vmem:[#allocation5 + $0x354] sm:$0xf]
    %v433 = vld [vmem:[#allocation5 + $0x358] sm:$0xf]
    %v434 = vld [vmem:[#allocation5 + $0x35c] sm:$0xf]
    %v435 = vld [vmem:[#allocation5 + $0x360] sm:$0xf]
    %v436 = vld [vmem:[#allocation5 + $0x364] sm:$0xf]
    %v437 = vld [vmem:[#allocation5 + $0x368] sm:$0xf]
    %v438 = vld [vmem:[#allocation5 + $0x36c] sm:$0xf]
    %v439 = vld [vmem:[#allocation5 + $0x370] sm:$0xf]
    %v440 = vld [vmem:[#allocation5 + $0x374] sm:$0xf]
    %v441 = vld [vmem:[#allocation5 + $0x378] sm:$0xf]
    %v442 = vld [vmem:[#allocation5 + $0x37c] sm:$0xf]
    %v443 = vld [vmem:[#allocation5 + $0x380] sm:$0xf]
    %v444 = vld [vmem:[#allocation5 + $0x384] sm:$0xf]
    %v445 = vld [vmem:[#allocation5 + $0x388] sm:$0xf]
    %v446 = vld [vmem:[#allocation5 + $0x38c] sm:$0xf]
    %v447 = vld [vmem:[#allocation5 + $0x390] sm:$0xf]
    %v448 = vld [vmem:[#allocation5 + $0x394] sm:$0xf]
    %v449 = vld [vmem:[#allocation5 + $0x398] sm:$0xf]
    %v450 = vld [vmem:[#allocation5 + $0x39c] sm:$0xf]
    %v451 = vld [vmem:[#allocation5 + $0x3a0] sm:$0xf]
    %v452 = vld [vmem:[#allocation5 + $0x3a4] sm:$0xf]
    %v453 = vld [vmem:[#allocation5 + $0x3a8] sm:$0xf]
    %v454 = vld [vmem:[#allocation5 + $0x3ac] sm:$0xf]
    %v455 = vld [vmem:[#allocation5 + $0x3b0] sm:$0xf]
    %v456 = vld [vmem:[#allocation5 + $0x3b4] sm:$0xf]
    %v457 = vld [vmem:[#allocation5 + $0x3b8] sm:$0xf]
    %v458 = vld [vmem:[#allocation5 + $0x3bc] sm:$0xf]
    %v459 = vld [vmem:[#allocation5 + $0x3c0] sm:$0xf]
    %v460 = vld [vmem:[#allocation5 + $0x3c4] sm:$0xf]
    %v461 = vld [vmem:[#allocation5 + $0x3c8] sm:$0xf]
    %v462 = vld [vmem:[#allocation5 + $0x3cc] sm:$0xf]
    %v463 = vld [vmem:[#allocation5 + $0x3d0] sm:$0xf]
    %v464 = vld [vmem:[#allocation5 + $0x3d4] sm:$0xf]
    %v465 = vld [vmem:[#allocation5 + $0x3d8] sm:$0xf]
    %v466 = vld [vmem:[#allocation5 + $0x3dc] sm:$0xf]
    %v467 = vld [vmem:[#allocation5 + $0x3e0] sm:$0xf]
    %v468 = vld [vmem:[#allocation5 + $0x3e4] sm:$0xf]
    %v469 = vld [vmem:[#allocation5 + $0x3e8] sm:$0xf]
    %v470 = vld [vmem:[#allocation5 + $0x3ec] sm:$0xf]
    %v471 = vld [vmem:[#allocation5 + $0x3f0] sm:$0xf]
    %v472 = vld [vmem:[#allocation5 + $0x3f4] sm:$0xf]
    %v473 = vld [vmem:[#allocation5 + $0x3f8] sm:$0xf]
    %v474 = vld [vmem:[#allocation5 + $0x3fc] sm:$0xf]
    %v475 = vld [vmem:[#allocation5 + $0x400] sm:$0xf]
    %v476 = vld [vmem:[#allocation5 + $0x404] sm:$0xf]
    %v477 = vld [vmem:[#allocation5 + $0x408] sm:$0xf]
    %v478 = vld [vmem:[#allocation5 + $0x40c] sm:$0xf]
    %v479 = vld [vmem:[#allocation5 + $0x410] sm:$0xf]
    %v480 = vld [vmem:[#allocation5 + $0x414] sm:$0xf]
    %v481 = vld [vmem:[#allocation5 + $0x418] sm:$0xf]
    %v482 = vld [vmem:[#allocation5 + $0x41c] sm:$0xf]
    %v483 = vld [vmem:[#allocation5 + $0x420] sm:$0xf]
    %v484 = vld [vmem:[#allocation5 + $0x424] sm:$0xf]
    %v485 = vld [vmem:[#allocation5 + $0x428] sm:$0xf]
    %v486 = vld [vmem:[#allocation5 + $0x42c] sm:$0xf]
    %v487 = vld [vmem:[#allocation5 + $0x430] sm:$0xf]
    %v488 = vld [vmem:[#allocation5 + $0x434] sm:$0xf]
    %v489 = vld [vmem:[#allocation5 + $0x438] sm:$0xf]
    %v490 = vld [vmem:[#allocation5 + $0x43c] sm:$0xf]
    %v491 = vld [vmem:[#allocation5 + $0x440] sm:$0xf]
    %v492 = vld [vmem:[#allocation5 + $0x444] sm:$0xf]
    %v493 = vld [vmem:[#allocation5 + $0x448] sm:$0xf]
    %v494 = vld [vmem:[#allocation5 + $0x44c] sm:$0xf]
    %v495 = vld [vmem:[#allocation5 + $0x450] sm:$0xf]
    %v496 = vld [vmem:[#allocation5 + $0x454] sm:$0xf]
    %v497 = vld [vmem:[#allocation5 + $0x458] sm:$0xf]
    %v498 = vld [vmem:[#allocation5 + $0x45c] sm:$0xf]
    %v499 = vld [vmem:[#allocation5 + $0x460] sm:$0xf]
    %v500 = vld [vmem:[#allocation5 + $0x464] sm:$0xf]
    %v501 = vld [vmem:[#allocation5 + $0x468] sm:$0xf]
    %v502 = vld [vmem:[#allocation5 + $0x46c] sm:$0xf]
    %v503 = vld [vmem:[#allocation5 + $0x470] sm:$0xf]
    %v504 = vld [vmem:[#allocation5 + $0x474] sm:$0xf]
    %v505 = vld [vmem:[#allocation5 + $0x478] sm:$0xf]
    %v506 = vld [vmem:[#allocation5 + $0x47c] sm:$0xf]
    %v507 = vld [vmem:[#allocation5 + $0x480] sm:$0xf]
    %v508 = vld [vmem:[#allocation5 + $0x484] sm:$0xf]
    %v509 = vld [vmem:[#allocation5 + $0x488] sm:$0xf]
    %v510 = vld [vmem:[#allocation5 + $0x48c] sm:$0xf]
    %v511 = vld [vmem:[#allocation5 + $0x490] sm:$0xf]
    %v512 = vld [vmem:[#allocation5 + $0x494] sm:$0xf]
    %v513 = vld [vmem:[#allocation5 + $0x498] sm:$0xf]
    %v514 = vld [vmem:[#allocation5 + $0x49c] sm:$0xf]
    %v515 = vld [vmem:[#allocation5 + $0x4a0] sm:$0xf]
    %v516 = vld [vmem:[#allocation5 + $0x4a4] sm:$0xf]
    %v517 = vld [vmem:[#allocation5 + $0x4a8] sm:$0xf]
    %v518 = vld [vmem:[#allocation5 + $0x4ac] sm:$0xf]
    %v519 = vld [vmem:[#allocation5 + $0x4b0] sm:$0xf]
    %v520 = vld [vmem:[#allocation5 + $0x4b4] sm:$0xf]
    %v521 = vld [vmem:[#allocation5 + $0x4b8] sm:$0xf]
    %v522 = vld [vmem:[#allocation5 + $0x4bc] sm:$0xf]
    %v523 = vld [vmem:[#allocation5 + $0x4c0] sm:$0xf]
    %v524 = vld [vmem:[#allocation5 + $0x4c4] sm:$0xf]
    %v525 = vld [vmem:[#allocation5 + $0x4c8] sm:$0xf]
    %v526 = vld [vmem:[#allocation5 + $0x4cc] sm:$0xf]
    %v527 = vld [vmem:[#allocation5 + $0x4d0] sm:$0xf]
    %v528 = vld [vmem:[#allocation5 + $0x4d4] sm:$0xf]
    %v529 = vld [vmem:[#allocation5 + $0x4d8] sm:$0xf]
    %v530 = vld [vmem:[#allocation5 + $0x4dc] sm:$0xf]
    %v531 = vld [vmem:[#allocation5 + $0x4e0] sm:$0xf]
    %v532 = vld [vmem:[#allocation5 + $0x4e4] sm:$0xf]
    %v533 = vld [vmem:[#allocation5 + $0x4e8] sm:$0xf]
    %v534 = vld [vmem:[#allocation5 + $0x4ec] sm:$0xf]
    %v535 = vld [vmem:[#allocation5 + $0x4f0] sm:$0xf]
    %v536 = vld [vmem:[#allocation5 + $0x4f4] sm:$0xf]
    %v537 = vld [vmem:[#allocation5 + $0x4f8] sm:$0xf]
    %v538 = vld [vmem:[#allocation5 + $0x4fc] sm:$0xf]
    %v539 = vld [vmem:[#allocation5 + $0x500] sm:$0xf]
    %v540 = vld [vmem:[#allocation5 + $0x504] sm:$0xf]
    %v541 = vld [vmem:[#allocation5 + $0x508] sm:$0xf]
    %v542 = vld [vmem:[#allocation5 + $0x50c] sm:$0xf]
    %v543 = vld [vmem:[#allocation5 + $0x510] sm:$0xf]
    %v544 = vld [vmem:[#allocation5 + $0x514] sm:$0xf]
    %v545 = vld [vmem:[#allocation5 + $0x518] sm:$0xf]
    %v546 = vld [vmem:[#allocation5 + $0x51c] sm:$0xf]
    %v547 = vld [vmem:[#allocation5 + $0x520] sm:$0xf]
    %v548 = vld [vmem:[#allocation5 + $0x524] sm:$0xf]
    %v549 = vld [vmem:[#allocation5 + $0x528] sm:$0xf]
    %v550 = vld [vmem:[#allocation5 + $0x52c] sm:$0xf]
    %v551 = vld [vmem:[#allocation5 + $0x530] sm:$0xf]
    %v552 = vld [vmem:[#allocation5 + $0x534] sm:$0xf]
    %v553 = vld [vmem:[#allocation5 + $0x538] sm:$0xf]
    %v554 = vld [vmem:[#allocation5 + $0x53c] sm:$0xf]
    %v555 = vld [vmem:[#allocation5 + $0x540] sm:$0xf]
    %v556 = vld [vmem:[#allocation5 + $0x544] sm:$0xf]
    %v557 = vld [vmem:[#allocation5 + $0x548] sm:$0xf]
    %v558 = vld [vmem:[#allocation5 + $0x54c] sm:$0xf]
    %v559 = vld [vmem:[#allocation5 + $0x550] sm:$0xf]
    %v560 = vld [vmem:[#allocation5 + $0x554] sm:$0xf]
    %v561 = vld [vmem:[#allocation5 + $0x558] sm:$0xf]
    %v562 = vld [vmem:[#allocation5 + $0x55c] sm:$0xf]
    %v563 = vld [vmem:[#allocation5 + $0x560] sm:$0xf]
    %v564 = vld [vmem:[#allocation5 + $0x564] sm:$0xf]
    %v565 = vld [vmem:[#allocation5 + $0x568] sm:$0xf]
    %v566 = vld [vmem:[#allocation5 + $0x56c] sm:$0xf]
    %v567 = vld [vmem:[#allocation5 + $0x570] sm:$0xf]
    %v568 = vld [vmem:[#allocation5 + $0x574] sm:$0xf]
    %v569 = vld [vmem:[#allocation5 + $0x578] sm:$0xf]
    %v570 = vld [vmem:[#allocation5 + $0x57c] sm:$0xf]
    %v571 = vld [vmem:[#allocation5 + $0x580] sm:$0xf]
    %v572 = vld [vmem:[#allocation5 + $0x584] sm:$0xf]
    %v573 = vld [vmem:[#allocation5 + $0x588] sm:$0xf]
    %v574 = vld [vmem:[#allocation5 + $0x58c] sm:$0xf]
    %v575 = vld [vmem:[#allocation5 + $0x590] sm:$0xf]
    %v576 = vld [vmem:[#allocation5 + $0x594] sm:$0xf]
    %v577 = vld [vmem:[#allocation5 + $0x598] sm:$0xf]
    %v578 = vld [vmem:[#allocation5 + $0x59c] sm:$0xf]
    %v579 = vld [vmem:[#allocation5 + $0x5a0] sm:$0xf]
    %v580 = vld [vmem:[#allocation5 + $0x5a4] sm:$0xf]
    %v581 = vld [vmem:[#allocation5 + $0x5a8] sm:$0xf]
    %v582 = vld [vmem:[#allocation5 + $0x5ac] sm:$0xf]
    %v583 = vld [vmem:[#allocation5 + $0x5b0] sm:$0xf]
    %v584 = vld [vmem:[#allocation5 + $0x5b4] sm:$0xf]
    %v585 = vld [vmem:[#allocation5 + $0x5b8] sm:$0xf]
    %v586 = vld [vmem:[#allocation5 + $0x5bc] sm:$0xf]
    %v587 = vld [vmem:[#allocation5 + $0x5c0] sm:$0xf]
    %v588 = vld [vmem:[#allocation5 + $0x5c4] sm:$0xf]
    %v589 = vld [vmem:[#allocation5 + $0x5c8] sm:$0xf]
    %v590 = vld [vmem:[#allocation5 + $0x5cc] sm:$0xf]
    %v591 = vld [vmem:[#allocation5 + $0x5d0] sm:$0xf]
    %v592 = vld [vmem:[#allocation5 + $0x5d4] sm:$0xf]
    %v593 = vld [vmem:[#allocation5 + $0x5d8] sm:$0xf]
    %v594 = vld [vmem:[#allocation5 + $0x5dc] sm:$0xf]
    %v595 = vld [vmem:[#allocation5 + $0x5e0] sm:$0xf]
    %v596 = vld [vmem:[#allocation5 + $0x5e4] sm:$0xf]
    %v597 = vld [vmem:[#allocation5 + $0x5e8] sm:$0xf]
    %v598 = vld [vmem:[#allocation5 + $0x5ec] sm:$0xf]
    %v599 = vld [vmem:[#allocation5 + $0x5f0] sm:$0xf]
    %v600 = vld [vmem:[#allocation5 + $0x5f4] sm:$0xf]
    %v601 = vld [vmem:[#allocation5 + $0x5f8] sm:$0xf]
    %v602 = vld [vmem:[#allocation5 + $0x5fc] sm:$0xf]
    %v603 = vld [vmem:[%s2] sm:$0x1]
    %v605 = vperm.slane %v603, 0
    %v991 = vunpack.c.l.b16 %v219
    %v992 = vunpack.c.l.b16 %v220
    %v993 = vunpack.c.l.b16 %v221
    %v994 = vunpack.c.l.b16 %v222
    %v995 = vunpack.c.l.b16 %v223
    %v996 = vunpack.c.l.b16 %v224
    %v997 = vunpack.c.l.b16 %v225
    %v998 = vunpack.c.l.b16 %v226
    %v999 = vunpack.c.l.b16 %v227
    %v1000 = vunpack.c.l.b16 %v228
    %v1001 = vunpack.c.l.b16 %v229
    %v1002 = vunpack.c.l.b16 %v230
    %v1003 = vunpack.c.l.b16 %v231
    %v1004 = vunpack.c.l.b16 %v232
    %v1005 = vunpack.c.l.b16 %v233
    %v1006 = vunpack.c.l.b16 %v234
    %v1007 = vunpack.c.l.b16 %v235
    %v1008 = vunpack.c.l.b16 %v236
    %v1009 = vunpack.c.l.b16 %v237
    %v1010 = vunpack.c.l.b16 %v238
    %v1011 = vunpack.c.l.b16 %v239
    %v1012 = vunpack.c.l.b16 %v240
    %v1013 = vunpack.c.l.b16 %v241
    %v1014 = vunpack.c.l.b16 %v242
    %v1015 = vunpack.c.l.b16 %v243
    %v1016 = vunpack.c.l.b16 %v244
    %v1017 = vunpack.c.l.b16 %v245
    %v1018 = vunpack.c.l.b16 %v246
    %v1019 = vunpack.c.l.b16 %v247
    %v1020 = vunpack.c.l.b16 %v248
    %v1021 = vunpack.c.l.b16 %v249
    %v1022 = vunpack.c.l.b16 %v250
    %v1023 = vunpack.c.l.b16 %v251
    %v1024 = vunpack.c.l.b16 %v252
    %v1025 = vunpack.c.l.b16 %v253
    %v1026 = vunpack.c.l.b16 %v254
    %v1027 = vunpack.c.l.b16 %v255
    %v1028 = vunpack.c.l.b16 %v256
    %v1029 = vunpack.c.l.b16 %v257
    %v1030 = vunpack.c.l.b16 %v258
    %v1031 = vunpack.c.l.b16 %v259
    %v1032 = vunpack.c.l.b16 %v260
    %v1033 = vunpack.c.l.b16 %v261
    %v1034 = vunpack.c.l.b16 %v262
    %v1035 = vunpack.c.l.b16 %v263
    %v1036 = vunpack.c.l.b16 %v264
    %v1037 = vunpack.c.l.b16 %v265
    %v1038 = vunpack.c.l.b16 %v266
    %v1039 = vunpack.c.l.b16 %v267
    %v1040 = vunpack.c.l.b16 %v268
    %v1041 = vunpack.c.l.b16 %v269
    %v1042 = vunpack.c.l.b16 %v270
    %v1043 = vunpack.c.l.b16 %v271
    %v1044 = vunpack.c.l.b16 %v272
    %v1045 = vunpack.c.l.b16 %v273
    %v1046 = vunpack.c.l.b16 %v274
    %v1047 = vunpack.c.l.b16 %v275
    %v1048 = vunpack.c.l.b16 %v276
    %v1049 = vunpack.c.l.b16 %v277
    %v1050 = vunpack.c.l.b16 %v278
    %v1051 = vunpack.c.l.b16 %v279
    %v1052 = vunpack.c.l.b16 %v280
    %v1053 = vunpack.c.l.b16 %v281
    %v1054 = vunpack.c.l.b16 %v282
    %v1055 = vunpack.c.l.b16 %v283
    %v1056 = vunpack.c.l.b16 %v284
    %v1057 = vunpack.c.l.b16 %v285
    %v1058 = vunpack.c.l.b16 %v286
    %v1059 = vunpack.c.l.b16 %v287
    %v1060 = vunpack.c.l.b16 %v288
    %v1061 = vunpack.c.l.b16 %v289
    %v1062 = vunpack.c.l.b16 %v290
    %v1063 = vunpack.c.l.b16 %v291
    %v1064 = vunpack.c.l.b16 %v292
    %v1065 = vunpack.c.l.b16 %v293
    %v1066 = vunpack.c.l.b16 %v294
    %v1067 = vunpack.c.l.b16 %v295
    %v1068 = vunpack.c.l.b16 %v296
    %v1069 = vunpack.c.l.b16 %v297
    %v1070 = vunpack.c.l.b16 %v298
    %v1071 = vunpack.c.l.b16 %v299
    %v1072 = vunpack.c.l.b16 %v300
    %v1073 = vunpack.c.l.b16 %v301
    %v1074 = vunpack.c.l.b16 %v302
    %v1075 = vunpack.c.l.b16 %v303
    %v1076 = vunpack.c.l.b16 %v304
    %v1077 = vunpack.c.l.b16 %v305
    %v1078 = vunpack.c.l.b16 %v306
    %v1079 = vunpack.c.l.b16 %v307
    %v1080 = vunpack.c.l.b16 %v308
    %v1081 = vunpack.c.l.b16 %v309
    %v1082 = vunpack.c.l.b16 %v310
    %v1083 = vunpack.c.l.b16 %v311
    %v1084 = vunpack.c.l.b16 %v312
    %v1085 = vunpack.c.l.b16 %v313
    %v1086 = vunpack.c.l.b16 %v314
    %v1087 = vunpack.c.l.b16 %v315
    %v1088 = vunpack.c.l.b16 %v316
    %v1089 = vunpack.c.l.b16 %v317
    %v1090 = vunpack.c.l.b16 %v318
    %v1091 = vunpack.c.l.b16 %v319
    %v1092 = vunpack.c.l.b16 %v320
    %v1093 = vunpack.c.l.b16 %v321
    %v1094 = vunpack.c.l.b16 %v322
    %v1095 = vunpack.c.l.b16 %v323
    %v1096 = vunpack.c.l.b16 %v324
    %v1097 = vunpack.c.l.b16 %v325
    %v1098 = vunpack.c.l.b16 %v326
    %v1099 = vunpack.c.l.b16 %v327
    %v1100 = vunpack.c.l.b16 %v328
    %v1101 = vunpack.c.l.b16 %v329
    %v1102 = vunpack.c.l.b16 %v330
    %v1103 = vunpack.c.l.b16 %v331
    %v1104 = vunpack.c.l.b16 %v332
    %v1105 = vunpack.c.l.b16 %v333
    %v1106 = vunpack.c.l.b16 %v334
    %v1107 = vunpack.c.l.b16 %v335
    %v1108 = vunpack.c.l.b16 %v336
    %v1109 = vunpack.c.l.b16 %v337
    %v1110 = vunpack.c.l.b16 %v338
    %v1111 = vunpack.c.l.b16 %v339
    %v1112 = vunpack.c.l.b16 %v340
    %v1113 = vunpack.c.l.b16 %v341
    %v1114 = vunpack.c.l.b16 %v342
    %v1115 = vunpack.c.l.b16 %v343
    %v1116 = vunpack.c.l.b16 %v344
    %v1117 = vunpack.c.l.b16 %v345
    %v1118 = vunpack.c.l.b16 %v346
    %v1119 = vunpack.c.l.b16 %v347
    %v1120 = vunpack.c.l.b16 %v348
    %v1121 = vunpack.c.l.b16 %v349
    %v1122 = vunpack.c.l.b16 %v350
    %v1123 = vunpack.c.l.b16 %v351
    %v1124 = vunpack.c.l.b16 %v352
    %v1125 = vunpack.c.l.b16 %v353
    %v1126 = vunpack.c.l.b16 %v354
    %v1127 = vunpack.c.l.b16 %v355
    %v1128 = vunpack.c.l.b16 %v356
    %v1129 = vunpack.c.l.b16 %v357
    %v1130 = vunpack.c.l.b16 %v358
    %v1131 = vunpack.c.l.b16 %v359
    %v1132 = vunpack.c.l.b16 %v360
    %v1133 = vunpack.c.l.b16 %v361
    %v1134 = vunpack.c.l.b16 %v362
    %v1135 = vunpack.c.l.b16 %v363
    %v1136 = vunpack.c.l.b16 %v364
    %v1137 = vunpack.c.l.b16 %v365
    %v1138 = vunpack.c.l.b16 %v366
    %v1139 = vunpack.c.l.b16 %v367
    %v1140 = vunpack.c.l.b16 %v368
    %v1141 = vunpack.c.l.b16 %v369
    %v1142 = vunpack.c.l.b16 %v370
    %v1143 = vunpack.c.l.b16 %v371
    %v1144 = vunpack.c.l.b16 %v372
    %v1145 = vunpack.c.l.b16 %v373
    %v1146 = vunpack.c.l.b16 %v374
    %v1147 = vunpack.c.l.b16 %v375
    %v1148 = vunpack.c.l.b16 %v376
    %v1149 = vunpack.c.l.b16 %v377
    %v1150 = vunpack.c.l.b16 %v378
    %v1151 = vunpack.c.l.b16 %v379
    %v1152 = vunpack.c.l.b16 %v380
    %v1153 = vunpack.c.l.b16 %v381
    %v1154 = vunpack.c.l.b16 %v382
    %v1155 = vunpack.c.l.b16 %v383
    %v1156 = vunpack.c.l.b16 %v384
    %v1157 = vunpack.c.l.b16 %v385
    %v1158 = vunpack.c.l.b16 %v386
    %v1159 = vunpack.c.l.b16 %v387
    %v1160 = vunpack.c.l.b16 %v388
    %v1161 = vunpack.c.l.b16 %v389
    %v1162 = vunpack.c.l.b16 %v390
    %v1163 = vunpack.c.l.b16 %v391
    %v1164 = vunpack.c.l.b16 %v392
    %v1165 = vunpack.c.l.b16 %v393
    %v1166 = vunpack.c.l.b16 %v394
    %v1167 = vunpack.c.l.b16 %v395
    %v1168 = vunpack.c.l.b16 %v396
    %v1169 = vunpack.c.l.b16 %v397
    %v1170 = vunpack.c.l.b16 %v398
    %v1171 = vunpack.c.l.b16 %v399
    %v1172 = vunpack.c.l.b16 %v400
    %v1173 = vunpack.c.l.b16 %v401
    %v1174 = vunpack.c.l.b16 %v402
    %v1175 = vunpack.c.l.b16 %v403
    %v1176 = vunpack.c.l.b16 %v404
    %v1177 = vunpack.c.l.b16 %v405
    %v1178 = vunpack.c.l.b16 %v406
    %v1179 = vunpack.c.l.b16 %v407
    %v1180 = vunpack.c.l.b16 %v408
    %v1181 = vunpack.c.l.b16 %v409
    %v1182 = vunpack.c.l.b16 %v410
    %v1183 = vunpack.c.l.b16 %v411
    %v1184 = vunpack.c.l.b16 %v412
    %v1185 = vunpack.c.l.b16 %v413
    %v1186 = vunpack.c.l.b16 %v414
    %v1187 = vunpack.c.l.b16 %v415
    %v1188 = vunpack.c.l.b16 %v416
    %v1189 = vunpack.c.l.b16 %v417
    %v1190 = vunpack.c.l.b16 %v418
    %v1191 = vunpack.c.l.b16 %v419
    %v1192 = vunpack.c.l.b16 %v420
    %v1193 = vunpack.c.l.b16 %v421
    %v1194 = vunpack.c.l.b16 %v422
    %v1195 = vunpack.c.l.b16 %v423
    %v1196 = vunpack.c.l.b16 %v424
    %v1197 = vunpack.c.l.b16 %v425
    %v1198 = vunpack.c.l.b16 %v426
    %v1199 = vunpack.c.l.b16 %v427
    %v1200 = vunpack.c.l.b16 %v428
    %v1201 = vunpack.c.l.b16 %v429
    %v1202 = vunpack.c.l.b16 %v430
    %v1203 = vunpack.c.l.b16 %v431
    %v1204 = vunpack.c.l.b16 %v432
    %v1205 = vunpack.c.l.b16 %v433
    %v1206 = vunpack.c.l.b16 %v434
    %v1207 = vunpack.c.l.b16 %v435
    %v1208 = vunpack.c.l.b16 %v436
    %v1209 = vunpack.c.l.b16 %v437
    %v1210 = vunpack.c.l.b16 %v438
    %v1211 = vunpack.c.l.b16 %v439
    %v1212 = vunpack.c.l.b16 %v440
    %v1213 = vunpack.c.l.b16 %v441
    %v1214 = vunpack.c.l.b16 %v442
    %v1215 = vunpack.c.l.b16 %v443
    %v1216 = vunpack.c.l.b16 %v444
    %v1217 = vunpack.c.l.b16 %v445
    %v1218 = vunpack.c.l.b16 %v446
    %v1219 = vunpack.c.l.b16 %v447
    %v1220 = vunpack.c.l.b16 %v448
    %v1221 = vunpack.c.l.b16 %v449
    %v1222 = vunpack.c.l.b16 %v450
    %v1223 = vunpack.c.l.b16 %v451
    %v1224 = vunpack.c.l.b16 %v452
    %v1225 = vunpack.c.l.b16 %v453
    %v1226 = vunpack.c.l.b16 %v454
    %v1227 = vunpack.c.l.b16 %v455
    %v1228 = vunpack.c.l.b16 %v456
    %v1229 = vunpack.c.l.b16 %v457
    %v1230 = vunpack.c.l.b16 %v458
    %v1231 = vunpack.c.l.b16 %v459
    %v1232 = vunpack.c.l.b16 %v460
    %v1233 = vunpack.c.l.b16 %v461
    %v1234 = vunpack.c.l.b16 %v462
    %v1235 = vunpack.c.l.b16 %v463
    %v1236 = vunpack.c.l.b16 %v464
    %v1237 = vunpack.c.l.b16 %v465
    %v1238 = vunpack.c.l.b16 %v466
    %v1239 = vunpack.c.l.b16 %v467
    %v1240 = vunpack.c.l.b16 %v468
    %v1241 = vunpack.c.l.b16 %v469
    %v1242 = vunpack.c.l.b16 %v470
    %v1243 = vunpack.c.l.b16 %v471
    %v1244 = vunpack.c.l.b16 %v472
    %v1245 = vunpack.c.l.b16 %v473
    %v1246 = vunpack.c.l.b16 %v474
    %v1247 = vunpack.c.l.b16 %v475
    %v1248 = vunpack.c.l.b16 %v476
    %v1249 = vunpack.c.l.b16 %v477
    %v1250 = vunpack.c.l.b16 %v478
    %v1251 = vunpack.c.l.b16 %v479
    %v1252 = vunpack.c.l.b16 %v480
    %v1253 = vunpack.c.l.b16 %v481
    %v1254 = vunpack.c.l.b16 %v482
    %v1255 = vunpack.c.l.b16 %v483
    %v1256 = vunpack.c.l.b16 %v484
    %v1257 = vunpack.c.l.b16 %v485
    %v1258 = vunpack.c.l.b16 %v486
    %v1259 = vunpack.c.l.b16 %v487
    %v1260 = vunpack.c.l.b16 %v488
    %v1261 = vunpack.c.l.b16 %v489
    %v1262 = vunpack.c.l.b16 %v490
    %v1263 = vunpack.c.l.b16 %v491
    %v1264 = vunpack.c.l.b16 %v492
    %v1265 = vunpack.c.l.b16 %v493
    %v1266 = vunpack.c.l.b16 %v494
    %v1267 = vunpack.c.l.b16 %v495
    %v1268 = vunpack.c.l.b16 %v496
    %v1269 = vunpack.c.l.b16 %v497
    %v1270 = vunpack.c.l.b16 %v498
    %v1271 = vunpack.c.l.b16 %v499
    %v1272 = vunpack.c.l.b16 %v500
    %v1273 = vunpack.c.l.b16 %v501
    %v1274 = vunpack.c.l.b16 %v502
    %v1275 = vunpack.c.l.b16 %v503
    %v1276 = vunpack.c.l.b16 %v504
    %v1277 = vunpack.c.l.b16 %v505
    %v1278 = vunpack.c.l.b16 %v506
    %v1279 = vunpack.c.l.b16 %v507
    %v1280 = vunpack.c.l.b16 %v508
    %v1281 = vunpack.c.l.b16 %v509
    %v1282 = vunpack.c.l.b16 %v510
    %v1283 = vunpack.c.l.b16 %v511
    %v1284 = vunpack.c.l.b16 %v512
    %v1285 = vunpack.c.l.b16 %v513
    %v1286 = vunpack.c.l.b16 %v514
    %v1287 = vunpack.c.l.b16 %v515
    %v1288 = vunpack.c.l.b16 %v516
    %v1289 = vunpack.c.l.b16 %v517
    %v1290 = vunpack.c.l.b16 %v518
    %v1291 = vunpack.c.l.b16 %v519
    %v1292 = vunpack.c.l.b16 %v520
    %v1293 = vunpack.c.l.b16 %v521
    %v1294 = vunpack.c.l.b16 %v522
    %v1295 = vunpack.c.l.b16 %v523
    %v1296 = vunpack.c.l.b16 %v524
    %v1297 = vunpack.c.l.b16 %v525
    %v1298 = vunpack.c.l.b16 %v526
    %v1299 = vunpack.c.l.b16 %v527
    %v1300 = vunpack.c.l.b16 %v528
    %v1301 = vunpack.c.l.b16 %v529
    %v1302 = vunpack.c.l.b16 %v530
    %v1303 = vunpack.c.l.b16 %v531
    %v1304 = vunpack.c.l.b16 %v532
    %v1305 = vunpack.c.l.b16 %v533
    %v1306 = vunpack.c.l.b16 %v534
    %v1307 = vunpack.c.l.b16 %v535
    %v1308 = vunpack.c.l.b16 %v536
    %v1309 = vunpack.c.l.b16 %v537
    %v1310 = vunpack.c.l.b16 %v538
    %v1311 = vunpack.c.l.b16 %v539
    %v1312 = vunpack.c.l.b16 %v540
    %v1313 = vunpack.c.l.b16 %v541
    %v1314 = vunpack.c.l.b16 %v542
    %v1315 = vunpack.c.l.b16 %v543
    %v1316 = vunpack.c.l.b16 %v544
    %v1317 = vunpack.c.l.b16 %v545
    %v1318 = vunpack.c.l.b16 %v546
    %v1319 = vunpack.c.l.b16 %v547
    %v1320 = vunpack.c.l.b16 %v548
    %v1321 = vunpack.c.l.b16 %v549
    %v1322 = vunpack.c.l.b16 %v550
    %v1323 = vunpack.c.l.b16 %v551
    %v1324 = vunpack.c.l.b16 %v552
    %v1325 = vunpack.c.l.b16 %v553
    %v1326 = vunpack.c.l.b16 %v554
    %v1327 = vunpack.c.l.b16 %v555
    %v1328 = vunpack.c.l.b16 %v556
    %v1329 = vunpack.c.l.b16 %v557
    %v1330 = vunpack.c.l.b16 %v558
    %v1331 = vunpack.c.l.b16 %v559
    %v1332 = vunpack.c.l.b16 %v560
    %v1333 = vunpack.c.l.b16 %v561
    %v1334 = vunpack.c.l.b16 %v562
    %v1335 = vunpack.c.l.b16 %v563
    %v1336 = vunpack.c.l.b16 %v564
    %v1337 = vunpack.c.l.b16 %v565
    %v1338 = vunpack.c.l.b16 %v566
    %v1339 = vunpack.c.l.b16 %v567
    %v1340 = vunpack.c.l.b16 %v568
    %v1341 = vunpack.c.l.b16 %v569
    %v1342 = vunpack.c.l.b16 %v570
    %v1343 = vunpack.c.l.b16 %v571
    %v1344 = vunpack.c.l.b16 %v572
    %v1345 = vunpack.c.l.b16 %v573
    %v1346 = vunpack.c.l.b16 %v574
    %v1347 = vunpack.c.l.b16 %v575
    %v1348 = vunpack.c.l.b16 %v576
    %v1349 = vunpack.c.l.b16 %v577
    %v1350 = vunpack.c.l.b16 %v578
    %v1351 = vunpack.c.l.b16 %v579
    %v1352 = vunpack.c.l.b16 %v580
    %v1353 = vunpack.c.l.b16 %v581
    %v1354 = vunpack.c.l.b16 %v582
    %v1355 = vunpack.c.l.b16 %v583
    %v1356 = vunpack.c.l.b16 %v584
    %v1357 = vunpack.c.l.b16 %v585
    %v1358 = vunpack.c.l.b16 %v586
    %v1359 = vunpack.c.l.b16 %v587
    %v1360 = vunpack.c.l.b16 %v588
    %v1361 = vunpack.c.l.b16 %v589
    %v1362 = vunpack.c.l.b16 %v590
    %v1363 = vunpack.c.l.b16 %v591
    %v1364 = vunpack.c.l.b16 %v592
    %v1365 = vunpack.c.l.b16 %v593
    %v1366 = vunpack.c.l.b16 %v594
    %v1367 = vunpack.c.l.b16 %v595
    %v1368 = vunpack.c.l.b16 %v596
    %v1369 = vunpack.c.l.b16 %v597
    %v1370 = vunpack.c.l.b16 %v598
    %v1371 = vunpack.c.l.b16 %v599
    %v1372 = vunpack.c.l.b16 %v600
    %v1373 = vunpack.c.l.b16 %v601
    %v1374 = vunpack.c.l.b16 %v602
    %v1375 = vpack.c.b16 %v992, %v991
    %v1376 = vpack.c.b16 %v994, %v993
    %v1377 = vpack.c.b16 %v996, %v995
    %v1378 = vpack.c.b16 %v998, %v997
    %v1379 = vpack.c.b16 %v1000, %v999
    %v1380 = vpack.c.b16 %v1002, %v1001
    %v1381 = vpack.c.b16 %v1004, %v1003
    %v1382 = vpack.c.b16 %v1006, %v1005
    %v1383 = vpack.c.b16 %v1008, %v1007
    %v1384 = vpack.c.b16 %v1010, %v1009
    %v1385 = vpack.c.b16 %v1012, %v1011
    %v1386 = vpack.c.b16 %v1014, %v1013
    %v1387 = vpack.c.b16 %v1016, %v1015
    %v1388 = vpack.c.b16 %v1018, %v1017
    %v1389 = vpack.c.b16 %v1020, %v1019
    %v1390 = vpack.c.b16 %v1022, %v1021
    %v1391 = vpack.c.b16 %v1024, %v1023
    %v1392 = vpack.c.b16 %v1026, %v1025
    %v1393 = vpack.c.b16 %v1028, %v1027
    %v1394 = vpack.c.b16 %v1030, %v1029
    %v1395 = vpack.c.b16 %v1032, %v1031
    %v1396 = vpack.c.b16 %v1034, %v1033
    %v1397 = vpack.c.b16 %v1036, %v1035
    %v1398 = vpack.c.b16 %v1038, %v1037
    %v1399 = vpack.c.b16 %v1040, %v1039
    %v1400 = vpack.c.b16 %v1042, %v1041
    %v1401 = vpack.c.b16 %v1044, %v1043
    %v1402 = vpack.c.b16 %v1046, %v1045
    %v1403 = vpack.c.b16 %v1048, %v1047
    %v1404 = vpack.c.b16 %v1050, %v1049
    %v1405 = vpack.c.b16 %v1052, %v1051
    %v1406 = vpack.c.b16 %v1054, %v1053
    %v1407 = vpack.c.b16 %v1056, %v1055
    %v1408 = vpack.c.b16 %v1058, %v1057
    %v1409 = vpack.c.b16 %v1060, %v1059
    %v1410 = vpack.c.b16 %v1062, %v1061
    %v1411 = vpack.c.b16 %v1064, %v1063
    %v1412 = vpack.c.b16 %v1066, %v1065
    %v1413 = vpack.c.b16 %v1068, %v1067
    %v1414 = vpack.c.b16 %v1070, %v1069
    %v1415 = vpack.c.b16 %v1072, %v1071
    %v1416 = vpack.c.b16 %v1074, %v1073
    %v1417 = vpack.c.b16 %v1076, %v1075
    %v1418 = vpack.c.b16 %v1078, %v1077
    %v1419 = vpack.c.b16 %v1080, %v1079
    %v1420 = vpack.c.b16 %v1082, %v1081
    %v1421 = vpack.c.b16 %v1084, %v1083
    %v1422 = vpack.c.b16 %v1086, %v1085
    %v1423 = vpack.c.b16 %v1088, %v1087
    %v1424 = vpack.c.b16 %v1090, %v1089
    %v1425 = vpack.c.b16 %v1092, %v1091
    %v1426 = vpack.c.b16 %v1094, %v1093
    %v1427 = vpack.c.b16 %v1096, %v1095
    %v1428 = vpack.c.b16 %v1098, %v1097
    %v1429 = vpack.c.b16 %v1100, %v1099
    %v1430 = vpack.c.b16 %v1102, %v1101
    %v1431 = vpack.c.b16 %v1104, %v1103
    %v1432 = vpack.c.b16 %v1106, %v1105
    %v1433 = vpack.c.b16 %v1108, %v1107
    %v1434 = vpack.c.b16 %v1110, %v1109
    %v1435 = vpack.c.b16 %v1112, %v1111
    %v1436 = vpack.c.b16 %v1114, %v1113
    %v1437 = vpack.c.b16 %v1116, %v1115
    %v1438 = vpack.c.b16 %v1118, %v1117
    %v1439 = vpack.c.b16 %v1120, %v1119
    %v1440 = vpack.c.b16 %v1122, %v1121
    %v1441 = vpack.c.b16 %v1124, %v1123
    %v1442 = vpack.c.b16 %v1126, %v1125
    %v1443 = vpack.c.b16 %v1128, %v1127
    %v1444 = vpack.c.b16 %v1130, %v1129
    %v1445 = vpack.c.b16 %v1132, %v1131
    %v1446 = vpack.c.b16 %v1134, %v1133
    %v1447 = vpack.c.b16 %v1136, %v1135
    %v1448 = vpack.c.b16 %v1138, %v1137
    %v1449 = vpack.c.b16 %v1140, %v1139
    %v1450 = vpack.c.b16 %v1142, %v1141
    %v1451 = vpack.c.b16 %v1144, %v1143
    %v1452 = vpack.c.b16 %v1146, %v1145
    %v1453 = vpack.c.b16 %v1148, %v1147
    %v1454 = vpack.c.b16 %v1150, %v1149
    %v1455 = vpack.c.b16 %v1152, %v1151
    %v1456 = vpack.c.b16 %v1154, %v1153
    %v1457 = vpack.c.b16 %v1156, %v1155
    %v1458 = vpack.c.b16 %v1158, %v1157
    %v1459 = vpack.c.b16 %v1160, %v1159
    %v1460 = vpack.c.b16 %v1162, %v1161
    %v1461 = vpack.c.b16 %v1164, %v1163
    %v1462 = vpack.c.b16 %v1166, %v1165
    %v1463 = vpack.c.b16 %v1168, %v1167
    %v1464 = vpack.c.b16 %v1170, %v1169
    %v1465 = vpack.c.b16 %v1172, %v1171
    %v1466 = vpack.c.b16 %v1174, %v1173
    %v1467 = vpack.c.b16 %v1176, %v1175
    %v1468 = vpack.c.b16 %v1178, %v1177
    %v1469 = vpack.c.b16 %v1180, %v1179
    %v1470 = vpack.c.b16 %v1182, %v1181
    %v1471 = vpack.c.b16 %v1184, %v1183
    %v1472 = vpack.c.b16 %v1186, %v1185
    %v1473 = vpack.c.b16 %v1188, %v1187
    %v1474 = vpack.c.b16 %v1190, %v1189
    %v1475 = vpack.c.b16 %v1192, %v1191
    %v1476 = vpack.c.b16 %v1194, %v1193
    %v1477 = vpack.c.b16 %v1196, %v1195
    %v1478 = vpack.c.b16 %v1198, %v1197
    %v1479 = vpack.c.b16 %v1200, %v1199
    %v1480 = vpack.c.b16 %v1202, %v1201
    %v1481 = vpack.c.b16 %v1204, %v1203
    %v1482 = vpack.c.b16 %v1206, %v1205
    %v1483 = vpack.c.b16 %v1208, %v1207
    %v1484 = vpack.c.b16 %v1210, %v1209
    %v1485 = vpack.c.b16 %v1212, %v1211
    %v1486 = vpack.c.b16 %v1214, %v1213
    %v1487 = vpack.c.b16 %v1216, %v1215
    %v1488 = vpack.c.b16 %v1218, %v1217
    %v1489 = vpack.c.b16 %v1220, %v1219
    %v1490 = vpack.c.b16 %v1222, %v1221
    %v1491 = vpack.c.b16 %v1224, %v1223
    %v1492 = vpack.c.b16 %v1226, %v1225
    %v1493 = vpack.c.b16 %v1228, %v1227
    %v1494 = vpack.c.b16 %v1230, %v1229
    %v1495 = vpack.c.b16 %v1232, %v1231
    %v1496 = vpack.c.b16 %v1234, %v1233
    %v1497 = vpack.c.b16 %v1236, %v1235
    %v1498 = vpack.c.b16 %v1238, %v1237
    %v1499 = vpack.c.b16 %v1240, %v1239
    %v1500 = vpack.c.b16 %v1242, %v1241
    %v1501 = vpack.c.b16 %v1244, %v1243
    %v1502 = vpack.c.b16 %v1246, %v1245
    %v1503 = vpack.c.b16 %v1248, %v1247
    %v1504 = vpack.c.b16 %v1250, %v1249
    %v1505 = vpack.c.b16 %v1252, %v1251
    %v1506 = vpack.c.b16 %v1254, %v1253
    %v1507 = vpack.c.b16 %v1256, %v1255
    %v1508 = vpack.c.b16 %v1258, %v1257
    %v1509 = vpack.c.b16 %v1260, %v1259
    %v1510 = vpack.c.b16 %v1262, %v1261
    %v1511 = vpack.c.b16 %v1264, %v1263
    %v1512 = vpack.c.b16 %v1266, %v1265
    %v1513 = vpack.c.b16 %v1268, %v1267
    %v1514 = vpack.c.b16 %v1270, %v1269
    %v1515 = vpack.c.b16 %v1272, %v1271
    %v1516 = vpack.c.b16 %v1274, %v1273
    %v1517 = vpack.c.b16 %v1276, %v1275
    %v1518 = vpack.c.b16 %v1278, %v1277
    %v1519 = vpack.c.b16 %v1280, %v1279
    %v1520 = vpack.c.b16 %v1282, %v1281
    %v1521 = vpack.c.b16 %v1284, %v1283
    %v1522 = vpack.c.b16 %v1286, %v1285
    %v1523 = vpack.c.b16 %v1288, %v1287
    %v1524 = vpack.c.b16 %v1290, %v1289
    %v1525 = vpack.c.b16 %v1292, %v1291
    %v1526 = vpack.c.b16 %v1294, %v1293
    %v1527 = vpack.c.b16 %v1296, %v1295
    %v1528 = vpack.c.b16 %v1298, %v1297
    %v1529 = vpack.c.b16 %v1300, %v1299
    %v1530 = vpack.c.b16 %v1302, %v1301
    %v1531 = vpack.c.b16 %v1304, %v1303
    %v1532 = vpack.c.b16 %v1306, %v1305
    %v1533 = vpack.c.b16 %v1308, %v1307
    %v1534 = vpack.c.b16 %v1310, %v1309
    %v1535 = vpack.c.b16 %v1312, %v1311
    %v1536 = vpack.c.b16 %v1314, %v1313
    %v1537 = vpack.c.b16 %v1316, %v1315
    %v1538 = vpack.c.b16 %v1318, %v1317
    %v1539 = vpack.c.b16 %v1320, %v1319
    %v1540 = vpack.c.b16 %v1322, %v1321
    %v1541 = vpack.c.b16 %v1324, %v1323
    %v1542 = vpack.c.b16 %v1326, %v1325
    %v1543 = vpack.c.b16 %v1328, %v1327
    %v1544 = vpack.c.b16 %v1330, %v1329
    %v1545 = vpack.c.b16 %v1332, %v1331
    %v1546 = vpack.c.b16 %v1334, %v1333
    %v1547 = vpack.c.b16 %v1336, %v1335
    %v1548 = vpack.c.b16 %v1338, %v1337
    %v1549 = vpack.c.b16 %v1340, %v1339
    %v1550 = vpack.c.b16 %v1342, %v1341
    %v1551 = vpack.c.b16 %v1344, %v1343
    %v1552 = vpack.c.b16 %v1346, %v1345
    %v1553 = vpack.c.b16 %v1348, %v1347
    %v1554 = vpack.c.b16 %v1350, %v1349
    %v1555 = vpack.c.b16 %v1352, %v1351
    %v1556 = vpack.c.b16 %v1354, %v1353
    %v1557 = vpack.c.b16 %v1356, %v1355
    %v1558 = vpack.c.b16 %v1358, %v1357
    %v1559 = vpack.c.b16 %v1360, %v1359
    %v1560 = vpack.c.b16 %v1362, %v1361
    %v1561 = vpack.c.b16 %v1364, %v1363
    %v1562 = vpack.c.b16 %v1366, %v1365
    %v1563 = vpack.c.b16 %v1368, %v1367
    %v1564 = vpack.c.b16 %v1370, %v1369
    %v1565 = vpack.c.b16 %v1372, %v1371
    %v1566 = vpack.c.b16 %v1374, %v1373
    %1759 = vmatpush.bf16.msra.mxu0 %v1382
    %1760 = vmatpush.bf16.msra.mxu0 %v1381
    %1761 = vmatpush.bf16.msra.mxu0 %v1380
    %1762 = vmatpush.bf16.msra.mxu0 %v1379
    %1763 = vmatpush.bf16.msra.mxu0 %v1378
    %1764 = vmatpush.bf16.msra.mxu0 %v1377
    %1765 = vmatpush.bf16.msra.mxu0 %v1376
    %1766 = vmatpush.bf16.msra.mxu0 %v1375
    %1767 = vmatmul.bf16.gmra.mxu0 %v195
    %v1768 = vpop.f32.mrf.mxu0
    %v1769 = vadd.f32 %v605, %v1768
    %v1770 = vpop.f32.mrf.mxu0
    %1771 = vdwg.mxu0
    %1772 = vmatpush.bf16.msra.mxu0 %v1390
    %1773 = vmatpush.bf16.msra.mxu0 %v1389
    %1774 = vmatpush.bf16.msra.mxu0 %v1388
    %1775 = vmatpush.bf16.msra.mxu0 %v1387
    %1776 = vmatpush.bf16.msra.mxu0 %v1386
    %1777 = vmatpush.bf16.msra.mxu0 %v1385
    %1778 = vmatpush.bf16.msra.mxu0 %v1384
    %1779 = vmatpush.bf16.msra.mxu0 %v1383
    %1780 = vmatmul.bf16.gmra.mxu0 %v196
    %v1781 = vpop.f32.mrf.mxu0
    %v1782 = vadd.f32 %v1769, %v1781
    %v1783 = vpop.f32.mrf.mxu0
    %1784 = vdwg.mxu0
    %1785 = vmatpush.bf16.msra.mxu0 %v1398
    %1786 = vmatpush.bf16.msra.mxu0 %v1397
    %1787 = vmatpush.bf16.msra.mxu0 %v1396
    %1788 = vmatpush.bf16.msra.mxu0 %v1395
    %1789 = vmatpush.bf16.msra.mxu0 %v1394
    %1790 = vmatpush.bf16.msra.mxu0 %v1393
    %1791 = vmatpush.bf16.msra.mxu0 %v1392
    %1792 = vmatpush.bf16.msra.mxu0 %v1391
    %1793 = vmatmul.bf16.gmra.mxu0 %v197
    %v1794 = vpop.f32.mrf.mxu0
    %v1795 = vadd.f32 %v1782, %v1794
    %v1796 = vpop.f32.mrf.mxu0
    %1797 = vdwg.mxu0
    %1798 = vmatpush.bf16.msra.mxu0 %v1406
    %1799 = vmatpush.bf16.msra.mxu0 %v1405
    %1800 = vmatpush.bf16.msra.mxu0 %v1404
    %1801 = vmatpush.bf16.msra.mxu0 %v1403
    %1802 = vmatpush.bf16.msra.mxu0 %v1402
    %1803 = vmatpush.bf16.msra.mxu0 %v1401
    %1804 = vmatpush.bf16.msra.mxu0 %v1400
    %1805 = vmatpush.bf16.msra.mxu0 %v1399
    %1806 = vmatmul.bf16.gmra.mxu0 %v198
    %v1807 = vpop.f32.mrf.mxu0
    %v1808 = vadd.f32 %v1795, %v1807
    %v1809 = vpop.f32.mrf.mxu0
    %1810 = vdwg.mxu0
    %1811 = vmatpush.bf16.msra.mxu0 %v1414
    %1812 = vmatpush.bf16.msra.mxu0 %v1413
    %1813 = vmatpush.bf16.msra.mxu0 %v1412
    %1814 = vmatpush.bf16.msra.mxu0 %v1411
    %1815 = vmatpush.bf16.msra.mxu0 %v1410
    %1816 = vmatpush.bf16.msra.mxu0 %v1409
    %1817 = vmatpush.bf16.msra.mxu0 %v1408
    %1818 = vmatpush.bf16.msra.mxu0 %v1407
    %1819 = vmatmul.bf16.gmra.mxu0 %v199
    %v1820 = vpop.f32.mrf.mxu0
    %v1821 = vadd.f32 %v1808, %v1820
    %v1822 = vpop.f32.mrf.mxu0
    %1823 = vdwg.mxu0
    %1824 = vmatpush.bf16.msra.mxu0 %v1422
    %1825 = vmatpush.bf16.msra.mxu0 %v1421
    %1826 = vmatpush.bf16.msra.mxu0 %v1420
    %1827 = vmatpush.bf16.msra.mxu0 %v1419
    %1828 = vmatpush.bf16.msra.mxu0 %v1418
    %1829 = vmatpush.bf16.msra.mxu0 %v1417
    %1830 = vmatpush.bf16.msra.mxu0 %v1416
    %1831 = vmatpush.bf16.msra.mxu0 %v1415
    %1832 = vmatmul.bf16.gmra.mxu0 %v200
    %v1833 = vpop.f32.mrf.mxu0
    %v1834 = vadd.f32 %v1821, %v1833
    %v1835 = vpop.f32.mrf.mxu0
    %1836 = vdwg.mxu0
    %1837 = vmatpush.bf16.msra.mxu0 %v1430
    %1838 = vmatpush.bf16.msra.mxu0 %v1429
    %1839 = vmatpush.bf16.msra.mxu0 %v1428
    %1840 = vmatpush.bf16.msra.mxu0 %v1427
    %1841 = vmatpush.bf16.msra.mxu0 %v1426
    %1842 = vmatpush.bf16.msra.mxu0 %v1425
    %1843 = vmatpush.bf16.msra.mxu0 %v1424
    %1844 = vmatpush.bf16.msra.mxu0 %v1423
    %1845 = vmatmul.bf16.gmra.mxu0 %v201
    %v1846 = vpop.f32.mrf.mxu0
    %v1847 = vadd.f32 %v1834, %v1846
    %v1848 = vpop.f32.mrf.mxu0
    %1849 = vdwg.mxu0
    %1850 = vmatpush.bf16.msra.mxu0 %v1438
    %1851 = vmatpush.bf16.msra.mxu0 %v1437
    %1852 = vmatpush.bf16.msra.mxu0 %v1436
    %1853 = vmatpush.bf16.msra.mxu0 %v1435
    %1854 = vmatpush.bf16.msra.mxu0 %v1434
    %1855 = vmatpush.bf16.msra.mxu0 %v1433
    %1856 = vmatpush.bf16.msra.mxu0 %v1432
    %1857 = vmatpush.bf16.msra.mxu0 %v1431
    %1858 = vmatmul.bf16.gmra.mxu0 %v202
    %v1859 = vpop.f32.mrf.mxu0
    %v1860 = vadd.f32 %v1847, %v1859
    %v1861 = vpop.f32.mrf.mxu0
    %1862 = vdwg.mxu0
    %1863 = vmatpush.bf16.msra.mxu0 %v1446
    %1864 = vmatpush.bf16.msra.mxu0 %v1445
    %1865 = vmatpush.bf16.msra.mxu0 %v1444
    %1866 = vmatpush.bf16.msra.mxu0 %v1443
    %1867 = vmatpush.bf16.msra.mxu0 %v1442
    %1868 = vmatpush.bf16.msra.mxu0 %v1441
    %1869 = vmatpush.bf16.msra.mxu0 %v1440
    %1870 = vmatpush.bf16.msra.mxu0 %v1439
    %1871 = vmatmul.bf16.gmra.mxu0 %v203
    %v1872 = vpop.f32.mrf.mxu0
    %v1873 = vadd.f32 %v1860, %v1872
    %v1874 = vpop.f32.mrf.mxu0
    %1875 = vdwg.mxu0
    %1876 = vmatpush.bf16.msra.mxu0 %v1454
    %1877 = vmatpush.bf16.msra.mxu0 %v1453
    %1878 = vmatpush.bf16.msra.mxu0 %v1452
    %1879 = vmatpush.bf16.msra.mxu0 %v1451
    %1880 = vmatpush.bf16.msra.mxu0 %v1450
    %1881 = vmatpush.bf16.msra.mxu0 %v1449
    %1882 = vmatpush.bf16.msra.mxu0 %v1448
    %1883 = vmatpush.bf16.msra.mxu0 %v1447
    %1884 = vmatmul.bf16.gmra.mxu0 %v204
    %v1885 = vpop.f32.mrf.mxu0
    %v1886 = vadd.f32 %v1873, %v1885
    %v1887 = vpop.f32.mrf.mxu0
    %1888 = vdwg.mxu0
    %1889 = vmatpush.bf16.msra.mxu0 %v1462
    %1890 = vmatpush.bf16.msra.mxu0 %v1461
    %1891 = vmatpush.bf16.msra.mxu0 %v1460
    %1892 = vmatpush.bf16.msra.mxu0 %v1459
    %1893 = vmatpush.bf16.msra.mxu0 %v1458
    %1894 = vmatpush.bf16.msra.mxu0 %v1457
    %1895 = vmatpush.bf16.msra.mxu0 %v1456
    %1896 = vmatpush.bf16.msra.mxu0 %v1455
    %1897 = vmatmul.bf16.gmra.mxu0 %v205
    %v1898 = vpop.f32.mrf.mxu0
    %v1899 = vadd.f32 %v1886, %v1898
    %v1900 = vpop.f32.mrf.mxu0
    %1901 = vdwg.mxu0
    %1902 = vmatpush.bf16.msra.mxu0 %v1470
    %1903 = vmatpush.bf16.msra.mxu0 %v1469
    %1904 = vmatpush.bf16.msra.mxu0 %v1468
    %1905 = vmatpush.bf16.msra.mxu0 %v1467
    %1906 = vmatpush.bf16.msra.mxu0 %v1466
    %1907 = vmatpush.bf16.msra.mxu0 %v1465
    %1908 = vmatpush.bf16.msra.mxu0 %v1464
    %1909 = vmatpush.bf16.msra.mxu0 %v1463
    %1910 = vmatmul.bf16.gmra.mxu0 %v206
    %v1911 = vpop.f32.mrf.mxu0
    %v1912 = vadd.f32 %v1899, %v1911
    %v1913 = vpop.f32.mrf.mxu0
    %1914 = vdwg.mxu0
    %1915 = vmatpush.bf16.msra.mxu0 %v1478
    %1916 = vmatpush.bf16.msra.mxu0 %v1477
    %1917 = vmatpush.bf16.msra.mxu0 %v1476
    %1918 = vmatpush.bf16.msra.mxu0 %v1475
    %1919 = vmatpush.bf16.msra.mxu0 %v1474
    %1920 = vmatpush.bf16.msra.mxu0 %v1473
    %1921 = vmatpush.bf16.msra.mxu0 %v1472
    %1922 = vmatpush.bf16.msra.mxu0 %v1471
    %1923 = vmatmul.bf16.gmra.mxu0 %v207
    %v1924 = vpop.f32.mrf.mxu0
    %v1925 = vadd.f32 %v1912, %v1924
    %v1926 = vpop.f32.mrf.mxu0
    %1927 = vdwg.mxu0
    %1928 = vmatpush.bf16.msra.mxu0 %v1486
    %1929 = vmatpush.bf16.msra.mxu0 %v1485
    %1930 = vmatpush.bf16.msra.mxu0 %v1484
    %1931 = vmatpush.bf16.msra.mxu0 %v1483
    %1932 = vmatpush.bf16.msra.mxu0 %v1482
    %1933 = vmatpush.bf16.msra.mxu0 %v1481
    %1934 = vmatpush.bf16.msra.mxu0 %v1480
    %1935 = vmatpush.bf16.msra.mxu0 %v1479
    %1936 = vmatmul.bf16.gmra.mxu0 %v208
    %v1937 = vpop.f32.mrf.mxu0
    %v1938 = vadd.f32 %v1925, %v1937
    %v1939 = vpop.f32.mrf.mxu0
    %1940 = vdwg.mxu0
    %1941 = vmatpush.bf16.msra.mxu0 %v1494
    %1942 = vmatpush.bf16.msra.mxu0 %v1493
    %1943 = vmatpush.bf16.msra.mxu0 %v1492
    %1944 = vmatpush.bf16.msra.mxu0 %v1491
    %1945 = vmatpush.bf16.msra.mxu0 %v1490
    %1946 = vmatpush.bf16.msra.mxu0 %v1489
    %1947 = vmatpush.bf16.msra.mxu0 %v1488
    %1948 = vmatpush.bf16.msra.mxu0 %v1487
    %1949 = vmatmul.bf16.gmra.mxu0 %v209
    %v1950 = vpop.f32.mrf.mxu0
    %v1951 = vadd.f32 %v1938, %v1950
    %v1952 = vpop.f32.mrf.mxu0
    %1953 = vdwg.mxu0
    %1954 = vmatpush.bf16.msra.mxu0 %v1502
    %1955 = vmatpush.bf16.msra.mxu0 %v1501
    %1956 = vmatpush.bf16.msra.mxu0 %v1500
    %1957 = vmatpush.bf16.msra.mxu0 %v1499
    %1958 = vmatpush.bf16.msra.mxu0 %v1498
    %1959 = vmatpush.bf16.msra.mxu0 %v1497
    %1960 = vmatpush.bf16.msra.mxu0 %v1496
    %1961 = vmatpush.bf16.msra.mxu0 %v1495
    %1962 = vmatmul.bf16.gmra.mxu0 %v210
    %v1963 = vpop.f32.mrf.mxu0
    %v1964 = vadd.f32 %v1951, %v1963
    %v1965 = vpop.f32.mrf.mxu0
    %1966 = vdwg.mxu0
    %1967 = vmatpush.bf16.msra.mxu0 %v1510
    %1968 = vmatpush.bf16.msra.mxu0 %v1509
    %1969 = vmatpush.bf16.msra.mxu0 %v1508
    %1970 = vmatpush.bf16.msra.mxu0 %v1507
    %1971 = vmatpush.bf16.msra.mxu0 %v1506
    %1972 = vmatpush.bf16.msra.mxu0 %v1505
    %1973 = vmatpush.bf16.msra.mxu0 %v1504
    %1974 = vmatpush.bf16.msra.mxu0 %v1503
    %1975 = vmatmul.bf16.gmra.mxu0 %v211
    %v1976 = vpop.f32.mrf.mxu0
    %v1977 = vadd.f32 %v1964, %v1976
    %v1978 = vpop.f32.mrf.mxu0
    %1979 = vdwg.mxu0
    %1980 = vmatpush.bf16.msra.mxu0 %v1518
    %1981 = vmatpush.bf16.msra.mxu0 %v1517
    %1982 = vmatpush.bf16.msra.mxu0 %v1516
    %1983 = vmatpush.bf16.msra.mxu0 %v1515
    %1984 = vmatpush.bf16.msra.mxu0 %v1514
    %1985 = vmatpush.bf16.msra.mxu0 %v1513
    %1986 = vmatpush.bf16.msra.mxu0 %v1512
    %1987 = vmatpush.bf16.msra.mxu0 %v1511
    %1988 = vmatmul.bf16.gmra.mxu0 %v212
    %v1989 = vpop.f32.mrf.mxu0
    %v1990 = vadd.f32 %v1977, %v1989
    %v1991 = vpop.f32.mrf.mxu0
    %1992 = vdwg.mxu0
    %1993 = vmatpush.bf16.msra.mxu0 %v1526
    %1994 = vmatpush.bf16.msra.mxu0 %v1525
    %1995 = vmatpush.bf16.msra.mxu0 %v1524
    %1996 = vmatpush.bf16.msra.mxu0 %v1523
    %1997 = vmatpush.bf16.msra.mxu0 %v1522
    %1998 = vmatpush.bf16.msra.mxu0 %v1521
    %1999 = vmatpush.bf16.msra.mxu0 %v1520
    %2000 = vmatpush.bf16.msra.mxu0 %v1519
    %2001 = vmatmul.bf16.gmra.mxu0 %v213
    %v2002 = vpop.f32.mrf.mxu0
    %v2003 = vadd.f32 %v1990, %v2002
    %v2004 = vpop.f32.mrf.mxu0
    %2005 = vdwg.mxu0
    %2006 = vmatpush.bf16.msra.mxu0 %v1534
    %2007 = vmatpush.bf16.msra.mxu0 %v1533
    %2008 = vmatpush.bf16.msra.mxu0 %v1532
    %2009 = vmatpush.bf16.msra.mxu0 %v1531
    %2010 = vmatpush.bf16.msra.mxu0 %v1530
    %2011 = vmatpush.bf16.msra.mxu0 %v1529
    %2012 = vmatpush.bf16.msra.mxu0 %v1528
    %2013 = vmatpush.bf16.msra.mxu0 %v1527
    %2014 = vmatmul.bf16.gmra.mxu0 %v214
    %v2015 = vpop.f32.mrf.mxu0
    %v2016 = vadd.f32 %v2003, %v2015
    %v2017 = vpop.f32.mrf.mxu0
    %2018 = vdwg.mxu0
    %2019 = vmatpush.bf16.msra.mxu0 %v1542
    %2020 = vmatpush.bf16.msra.mxu0 %v1541
    %2021 = vmatpush.bf16.msra.mxu0 %v1540
    %2022 = vmatpush.bf16.msra.mxu0 %v1539
    %2023 = vmatpush.bf16.msra.mxu0 %v1538
    %2024 = vmatpush.bf16.msra.mxu0 %v1537
    %2025 = vmatpush.bf16.msra.mxu0 %v1536
    %2026 = vmatpush.bf16.msra.mxu0 %v1535
    %2027 = vmatmul.bf16.gmra.mxu0 %v215
    %v2028 = vpop.f32.mrf.mxu0
    %v2029 = vadd.f32 %v2016, %v2028
    %v2030 = vpop.f32.mrf.mxu0
    %2031 = vdwg.mxu0
    %2032 = vmatpush.bf16.msra.mxu0 %v1550
    %2033 = vmatpush.bf16.msra.mxu0 %v1549
    %2034 = vmatpush.bf16.msra.mxu0 %v1548
    %2035 = vmatpush.bf16.msra.mxu0 %v1547
    %2036 = vmatpush.bf16.msra.mxu0 %v1546
    %2037 = vmatpush.bf16.msra.mxu0 %v1545
    %2038 = vmatpush.bf16.msra.mxu0 %v1544
    %2039 = vmatpush.bf16.msra.mxu0 %v1543
    %2040 = vmatmul.bf16.gmra.mxu0 %v216
    %v2041 = vpop.f32.mrf.mxu0
    %v2042 = vadd.f32 %v2029, %v2041
    %v2043 = vpop.f32.mrf.mxu0
    %2044 = vdwg.mxu0
    %2045 = vmatpush.bf16.msra.mxu0 %v1558
    %2046 = vmatpush.bf16.msra.mxu0 %v1557
    %2047 = vmatpush.bf16.msra.mxu0 %v1556
    %2048 = vmatpush.bf16.msra.mxu0 %v1555
    %2049 = vmatpush.bf16.msra.mxu0 %v1554
    %2050 = vmatpush.bf16.msra.mxu0 %v1553
    %2051 = vmatpush.bf16.msra.mxu0 %v1552
    %2052 = vmatpush.bf16.msra.mxu0 %v1551
    %2053 = vmatmul.bf16.gmra.mxu0 %v217
    %v2054 = vpop.f32.mrf.mxu0
    %v2055 = vadd.f32 %v2042, %v2054
    %v2056 = vpop.f32.mrf.mxu0
    %2057 = vdwg.mxu0
    %2058 = vmatpush.bf16.msra.mxu0 %v1566
    %2059 = vmatpush.bf16.msra.mxu0 %v1565
    %2060 = vmatpush.bf16.msra.mxu0 %v1564
    %2061 = vmatpush.bf16.msra.mxu0 %v1563
    %2062 = vmatpush.bf16.msra.mxu0 %v1562
    %2063 = vmatpush.bf16.msra.mxu0 %v1561
    %2064 = vmatpush.bf16.msra.mxu0 %v1560
    %2065 = vmatpush.bf16.msra.mxu0 %v1559
    %2066 = vmatmul.bf16.gmra.mxu0 %v218
    %v2067 = vpop.f32.mrf.mxu0
    %v2068 = vadd.f32 %v2055, %v2067
    %v2069 = vpop.f32.mrf.mxu0
    %2070 = vdwg.mxu0
    %v2071 = vmax.f32 %v2068, 0.0
    %v2072 = vpack.c.bf16 %v2071, %v2071
    %v2073 = vld [vmem:[#allocation7] sm:$0xf]
    %v2074 = vld [vmem:[#allocation7 + $0x4] sm:$0xf]
    %v2075 = vld [vmem:[#allocation7 + $0x8] sm:$0xf]
    %v2076 = vld [vmem:[#allocation7 + $0xc] sm:$0xf]
    %v2077 = vld [vmem:[#allocation7 + $0x10] sm:$0xf]
    %v2078 = vld [vmem:[#allocation7 + $0x14] sm:$0xf]
    %v2079 = vld [vmem:[#allocation7 + $0x18] sm:$0xf]
    %v2080 = vld [vmem:[#allocation7 + $0x1c] sm:$0xf]
    %v2081 = vld [vmem:[#allocation7 + $0x20] sm:$0xf]
    %v2082 = vld [vmem:[#allocation7 + $0x24] sm:$0xf]
    %v2083 = vld [vmem:[#allocation7 + $0x28] sm:$0xf]
    %v2084 = vld [vmem:[#allocation7 + $0x2c] sm:$0xf]
    %v2085 = vld [vmem:[#allocation7 + $0x30] sm:$0xf]
    %v2086 = vld [vmem:[#allocation7 + $0x34] sm:$0xf]
    %v2087 = vld [vmem:[#allocation7 + $0x38] sm:$0xf]
    %v2088 = vld [vmem:[#allocation7 + $0x3c] sm:$0xf]
    %v2089 = vld [vmem:[%s4] sm:$0x1]
    %v2091 = vperm.slane %v2089, 0
    %v2109 = vunpack.c.l.b16 %v2073
    %v2110 = vunpack.c.l.b16 %v2074
    %v2111 = vunpack.c.l.b16 %v2075
    %v2112 = vunpack.c.l.b16 %v2076
    %v2113 = vunpack.c.l.b16 %v2077
    %v2114 = vunpack.c.l.b16 %v2078
    %v2115 = vunpack.c.l.b16 %v2079
    %v2116 = vunpack.c.l.b16 %v2080
    %v2117 = vunpack.c.l.b16 %v2081
    %v2118 = vunpack.c.l.b16 %v2082
    %v2119 = vunpack.c.l.b16 %v2083
    %v2120 = vunpack.c.l.b16 %v2084
    %v2121 = vunpack.c.l.b16 %v2085
    %v2122 = vunpack.c.l.b16 %v2086
    %v2123 = vunpack.c.l.b16 %v2087
    %v2124 = vunpack.c.l.b16 %v2088
    %v2125 = vpack.c.b16 %v2110, %v2109
    %v2126 = vpack.c.b16 %v2112, %v2111
    %v2127 = vpack.c.b16 %v2114, %v2113
    %v2128 = vpack.c.b16 %v2116, %v2115
    %v2129 = vpack.c.b16 %v2118, %v2117
    %v2130 = vpack.c.b16 %v2120, %v2119
    %v2131 = vpack.c.b16 %v2122, %v2121
    %v2132 = vpack.c.b16 %v2124, %v2123
    %2141 = vmatpush.bf16.msra.mxu0 %v2132
    %2142 = vmatpush.bf16.msra.mxu0 %v2131
    %2143 = vmatpush.bf16.msra.mxu0 %v2130
    %2144 = vmatpush.bf16.msra.mxu0 %v2129
    %2145 = vmatpush.bf16.msra.mxu0 %v2128
    %2146 = vmatpush.bf16.msra.mxu0 %v2127
    %2147 = vmatpush.bf16.msra.mxu0 %v2126
    %2148 = vmatpush.bf16.msra.mxu0 %v2125
    %2149 = vmatmul.bf16.gmra.mxu0 %v2072
    %v2150 = vpop.f32.mrf.mxu0
    %v2151 = vadd.f32 %v2091, %v2150
    %v2152 = vpop.f32.mrf.mxu0
    %2153 = vdwg.mxu0
    %2154 = vst [vmem:[#allocation8] sm:$0xff] %v2151
    // Predicated region
    $region34: #{mlp_forward.1} parent=1 // pred_check
      _
    $region35: #{mlp_forward.1} parent=1 // pred_check_branch
      %2156 = sbr.rel (0) target = $region37
    $region36: #{mlp_forward.1} parent=1 // pred_region
      %2158 = vsyncadd [#allocation4], 96
      %s2159 = sshll.u32 [#allocation8], 4
      %s2160 = int_to_ptr.vmem [resolvable:$true] %s2159
      %s2161 = sshll.u32 %s5, 4
      %s2162 = int_to_ptr.hbm [resolvable:$true] %s2161
      %2167 = dma.vmem_to_hbm [thread:$0]  %s2160, 32, %s2162, [#allocation4], 32, 32, 2
    $region37: #{mlp_forward.1} parent=1 // pred_fallthru
      _
    // Predicated region
    $region38: #{mlp_forward.1} parent=1 // pred_check
      _
    $region39: #{mlp_forward.1} parent=1 // pred_check_branch
      %2169 = sbr.rel (0) target = $region41
    $region40: #{mlp_forward.1} parent=1 // pred_region
      %2171 = dma.done [#allocation4], 128
    $region41: #{mlp_forward.1} parent=1 // pred_fallthru
      _
    %2172 = vsyncpa [#allocation3], 1
    %2173 = vsyncpa [#allocation6], 1
    %2174 = vsyncpa [#allocation4], 1

</llo_original>
